<compile_context>
chip_gen: v5e
topology: v5e:2x2
jax: 0.10.0
libtpu: 0.0.40
codegen_flags: <defaults>
</compile_context>

<pallas_src>
import jax
import jax.numpy as jnp
from jax.experimental import pallas as pl
from jax.experimental.pallas import tpu as pltpu

NUM_HEADS = 4
LN_EPS = 1e-5  # torch.nn.LayerNorm default eps


def _layer_norm(x, w, b):
    mu = jnp.mean(x, axis=-1, keepdims=True)
    var = jnp.mean(jnp.square(x - mu), axis=-1, keepdims=True)
    return (x - mu) * jax.lax.rsqrt(var + LN_EPS) * w + b


def _gelu_exact(x):
    # torch.nn.GELU() default is the exact erf formulation.
    return 0.5 * x * (1.0 + jax.lax.erf(x * 0.7071067811865476))


def _make_kernel(seq, channels):
    c = channels
    hd = c // NUM_HEADS

    def kernel(
        x_ref,                     # (N, C) f32 — one batch element per grid step
        ln1_w_ref, ln1_b_ref,
        in_wt_ref, in_b_ref,       # fused QKV in-projection (C, 3C) bf16 / (1, 3C) f32
        out_wt_ref, out_b_ref,     # attention out-projection (C, C) bf16 / (1, C) f32
        ln2_w_ref, ln2_b_ref,
        ff1_wt_ref, ff1_b_ref,     # ff_self Linear 1 (pre-transposed, bf16)
        ff2_wt_ref, ff2_b_ref,     # ff_self Linear 2 (pre-transposed, bf16)
        o_ref,
        heads_ref,                 # VMEM scratch (N, C) f32: head-packed attention slab
    ):
        x = x_ref[...]                                   # (N, C) f32

        # ---- LayerNorm (pre-attention) + fused QKV projection ----
        x_ln = _layer_norm(x, ln1_w_ref[...], ln1_b_ref[...])
        qkv = jnp.dot(x_ln.astype(jnp.bfloat16), in_wt_ref[...],
                      preferred_element_type=jnp.float32) + in_b_ref[...]   # (N, 3C)
        qkv_bf = qkv.astype(jnp.bfloat16)                # matmul operand path only

        # ---- multi-head attention, heads statically unrolled (NUM_HEADS=4) ----
        # 1/sqrt(hd) is already folded into the Q weights/bias on the host.
        # Each head's normalized output lands in its lane slice of heads_ref;
        # the out-projection is ONE full-depth matmul after the loop.
        for hi in range(NUM_HEADS):
            qh = qkv_bf[:, hi * hd:(hi + 1) * hd]                        # (N, hd)
            kh = qkv_bf[:, c + hi * hd:c + (hi + 1) * hd]                # (N, hd)
            vh = qkv_bf[:, 2 * c + hi * hd:2 * c + (hi + 1) * hd]        # (N, hd)

            # QK^T without materializing a transpose (contract last dims).
            s = jnp.einsum('qd,kd->qk', qh, kh,
                           preferred_element_type=jnp.float32)           # (N, N) f32
            s = s - jnp.max(s, axis=-1, keepdims=True)
            p = jnp.exp(s)
            l_inv = pl.reciprocal(jnp.sum(p, axis=-1, keepdims=True),
                                  approx=True)                           # (N, 1)

            # Un-normalized PV, then normalize the narrow (N, hd) result.
            ho = jnp.dot(p.astype(jnp.bfloat16), vh,
                         preferred_element_type=jnp.float32) * l_inv     # (N, hd)
            heads_ref[:, hi * hd:(hi + 1) * hd] = ho

        # ---- single out-projection matmul over the head-packed slab ----
        attn = jnp.dot(heads_ref[...].astype(jnp.bfloat16), out_wt_ref[...],
                       preferred_element_type=jnp.float32)               # (N, C)
        y = attn + out_b_ref[...] + x                    # out_proj bias + first residual

        # ---- ff_self: LayerNorm -> Linear -> GELU -> Linear, + second residual ----
        y_ln = _layer_norm(y, ln2_w_ref[...], ln2_b_ref[...])
        h1 = jnp.dot(y_ln.astype(jnp.bfloat16), ff1_wt_ref[...],
                     preferred_element_type=jnp.float32) + ff1_b_ref[...]
        h1 = _gelu_exact(h1)
        h2 = jnp.dot(h1.astype(jnp.bfloat16), ff2_wt_ref[...],
                     preferred_element_type=jnp.float32) + ff2_b_ref[...]
        o_ref[...] = (h2 + y).astype(o_ref.dtype)

    return kernel


def init_params(key, channels):
    """Deterministic parameter init matching the PyTorch module's shapes."""
    c = channels
    keys = jax.random.split(key, 6)

    def u(k, shape, fan_in):
        bound = 1.0 / (fan_in ** 0.5)
        return jax.random.uniform(k, shape, jnp.float32, -bound, bound)

    return dict(
        ln1_w=jnp.ones((1, c), jnp.float32),
        ln1_b=jnp.zeros((1, c), jnp.float32),
        in_w=u(keys[0], (3 * c, c), c),          # mha.in_proj_weight  (3C, C)
        in_b=jnp.zeros((1, 3 * c), jnp.float32), # mha.in_proj_bias
        out_w=u(keys[1], (c, c), c),             # mha.out_proj.weight (C, C)
        out_b=jnp.zeros((1, c), jnp.float32),    # mha.out_proj.bias
        ln2_w=jnp.ones((1, c), jnp.float32),
        ln2_b=jnp.zeros((1, c), jnp.float32),
        ff1_w=u(keys[2], (c, c), c),             # ff_self Linear 1 weight
        ff1_b=u(keys[3], (1, c), c),
        ff2_w=u(keys[4], (c, c), c),             # ff_self Linear 2 weight
        ff2_b=u(keys[5], (1, c), c),
    )


def self_attention_forward(x, params, channels, size):
    b = x.shape[0]
    n = size * size
    c = channels
    assert c % NUM_HEADS == 0
    hd = c // NUM_HEADS
    scale = 1.0 / float(hd) ** 0.5

    # NCHW -> (B, N, C) -> (B*N, C); per-batch (N, C) blocks are cut by the grid.
    x_seq = (x.reshape(b, c, n).transpose(0, 2, 1)
              .reshape(b * n, c).astype(jnp.float32))

    # One-time host-side weight prep (glue only; semantics unchanged):
    #  * fold 1/sqrt(hd) into the Q third of the in-projection,
    #  * pre-transpose nn.Linear (out, in) weights,
    #  * pre-cast MXU weight operands to bf16 (f32 accumulation in-kernel).
    q_scale = jnp.concatenate(
        [jnp.full((c,), scale, jnp.float32), jnp.ones((2 * c,), jnp.float32)])
    in_w_scaled = params["in_w"] * q_scale[:, None]        # (3C, C)
    in_b_scaled = params["in_b"] * q_scale[None, :]        # (1, 3C) f32

    in_wt = in_w_scaled.T.astype(jnp.bfloat16)             # (C, 3C)
    out_wt = params["out_w"].T.astype(jnp.bfloat16)        # (C, C)
    ff1_wt = params["ff1_w"].T.astype(jnp.bfloat16)
    ff2_wt = params["ff2_w"].T.astype(jnp.bfloat16)

    param_list = [
        params["ln1_w"], params["ln1_b"],
        in_wt, in_b_scaled,
        out_wt, params["out_b"],
        params["ln2_w"], params["ln2_b"],
        ff1_wt, params["ff1_b"],
        ff2_wt, params["ff2_b"],
    ]

    def const_spec(arr):
        nd = arr.ndim
        # Constant block index: weights stay VMEM-resident across grid steps.
        return pl.BlockSpec(arr.shape, lambda bi, _nd=nd: (0,) * _nd)

    kernel = _make_kernel(n, c)

    out_seq = pl.pallas_call(
        kernel,
        out_shape=jax.ShapeDtypeStruct((b * n, c), jnp.float32),
        grid=(b,),
        in_specs=[pl.BlockSpec((n, c), lambda bi: (bi, 0))]
                 + [const_spec(p) for p in param_list],
        out_specs=pl.BlockSpec((n, c), lambda bi: (bi, 0)),
        scratch_shapes=[pltpu.VMEM((n, c), jnp.float32)],
        compiler_params=pltpu.CompilerParams(
            dimension_semantics=("parallel",),
            vmem_limit_bytes=32 * 1024 * 1024),
    )(x_seq, *param_list)

    # (B*N, C) -> (B, N, C) -> NCHW
    return out_seq.reshape(b, n, c).transpose(0, 2, 1).reshape(b, c, size, size)


if __name__ == "__main__":
    channels, size, batch = 32, 8, 2   # channels must be divisible by 4 heads
    key = jax.random.PRNGKey(0)
    kx, kp = jax.random.split(key)
    x = jax.random.normal(kx, (batch, channels, size, size), jnp.float32)
    params = init_params(kp, channels)

    out = self_attention_forward(x, params, channels, size)
    jax.block_until_ready(out)
    assert out.shape == (batch, channels, size, size)
    assert out.dtype == jnp.float32
    print("KERNEL_OK")
</pallas_src>

<mosaic_0001>
module attributes {stable_mosaic.version = 11 : i64} {
  func.func @kernel(%arg0: i32, %arg1: memref<64x32xf32, #tpu.memory_space<vmem>>, %arg2: memref<1x32xf32, #tpu.memory_space<vmem>>, %arg3: memref<1x32xf32, #tpu.memory_space<vmem>>, %arg4: memref<32x96xbf16, #tpu.memory_space<vmem>>, %arg5: memref<1x96xf32, #tpu.memory_space<vmem>>, %arg6: memref<32x32xbf16, #tpu.memory_space<vmem>>, %arg7: memref<1x32xf32, #tpu.memory_space<vmem>>, %arg8: memref<1x32xf32, #tpu.memory_space<vmem>>, %arg9: memref<1x32xf32, #tpu.memory_space<vmem>>, %arg10: memref<32x32xbf16, #tpu.memory_space<vmem>>, %arg11: memref<1x32xf32, #tpu.memory_space<vmem>>, %arg12: memref<32x32xbf16, #tpu.memory_space<vmem>>, %arg13: memref<1x32xf32, #tpu.memory_space<vmem>>, %arg14: memref<64x32xf32, #tpu.memory_space<vmem>>, %arg15: memref<64x32xf32, #tpu.memory_space<vmem>>) attributes {dimension_semantics = [#tpu.dimension_semantics<parallel>], iteration_bounds = array<i64: 2>, scalar_prefetch = 0 : i64, scratch_operands = 1 : i64, tpu.core_type = #tpu.core_type<tc>, window_params = [{transform_indices = @transform_0, window_bounds = array<i64: 64, 32>}, {pipeline_mode = #tpu.pipeline_mode<synchronous>, transform_indices = @transform_1, window_bounds = array<i64: 1, 32>}, {pipeline_mode = #tpu.pipeline_mode<synchronous>, transform_indices = @transform_2, window_bounds = array<i64: 1, 32>}, {pipeline_mode = #tpu.pipeline_mode<synchronous>, transform_indices = @transform_3, window_bounds = array<i64: 32, 96>}, {pipeline_mode = #tpu.pipeline_mode<synchronous>, transform_indices = @transform_4, window_bounds = array<i64: 1, 96>}, {pipeline_mode = #tpu.pipeline_mode<synchronous>, transform_indices = @transform_5, window_bounds = array<i64: 32, 32>}, {pipeline_mode = #tpu.pipeline_mode<synchronous>, transform_indices = @transform_6, window_bounds = array<i64: 1, 32>}, {pipeline_mode = #tpu.pipeline_mode<synchronous>, transform_indices = @transform_7, window_bounds = array<i64: 1, 32>}, {pipeline_mode = #tpu.pipeline_mode<synchronous>, transform_indices = @transform_8, window_bounds = array<i64: 1, 32>}, {pipeline_mode = #tpu.pipeline_mode<synchronous>, transform_indices = @transform_9, window_bounds = array<i64: 32, 32>}, {pipeline_mode = #tpu.pipeline_mode<synchronous>, transform_indices = @transform_10, window_bounds = array<i64: 1, 32>}, {pipeline_mode = #tpu.pipeline_mode<synchronous>, transform_indices = @transform_11, window_bounds = array<i64: 32, 32>}, {pipeline_mode = #tpu.pipeline_mode<synchronous>, transform_indices = @transform_12, window_bounds = array<i64: 1, 32>}, {transform_indices = @transform_13, window_bounds = array<i64: 64, 32>}]} {
    %c0 = arith.constant 0 : index
    %c0_0 = arith.constant 0 : index
    %0 = vector.load %arg1[%c0, %c0_0] : memref<64x32xf32, #tpu.memory_space<vmem>>, vector<64x32xf32>
    %c0_1 = arith.constant 0 : index
    %c0_2 = arith.constant 0 : index
    %1 = vector.load %arg2[%c0_1, %c0_2] : memref<1x32xf32, #tpu.memory_space<vmem>>, vector<1x32xf32>
    %c0_3 = arith.constant 0 : index
    %c0_4 = arith.constant 0 : index
    %2 = vector.load %arg3[%c0_3, %c0_4] : memref<1x32xf32, #tpu.memory_space<vmem>>, vector<1x32xf32>
    %cst = arith.constant dense<0.000000e+00> : vector<64xf32>
    %3 = vector.multi_reduction <add>, %0, %cst [1] : vector<64x32xf32> to vector<64xf32>
    %4 = vector.shape_cast %3 : vector<64xf32> to vector<64x1xf32>
    %cst_5 = arith.constant 3.200000e+01 : f32
    %5 = vector.broadcast %cst_5 : f32 to vector<64x1xf32>
    %6 = arith.divf %4, %5 : vector<64x1xf32>
    %7 = vector.broadcast %6 : vector<64x1xf32> to vector<64x32xf32>
    %8 = arith.subf %0, %7 : vector<64x32xf32>
    %9 = arith.mulf %8, %8 : vector<64x32xf32>
    %cst_6 = arith.constant dense<0.000000e+00> : vector<64xf32>
    %10 = vector.multi_reduction <add>, %9, %cst_6 [1] : vector<64x32xf32> to vector<64xf32>
    %11 = vector.shape_cast %10 : vector<64xf32> to vector<64x1xf32>
    %cst_7 = arith.constant 3.200000e+01 : f32
    %12 = vector.broadcast %cst_7 : f32 to vector<64x1xf32>
    %13 = arith.divf %11, %12 : vector<64x1xf32>
    %14 = vector.broadcast %6 : vector<64x1xf32> to vector<64x32xf32>
    %15 = arith.subf %0, %14 : vector<64x32xf32>
    %cst_8 = arith.constant 9.99999974E-6 : f32
    %16 = vector.broadcast %cst_8 : f32 to vector<64x1xf32>
    %17 = arith.addf %13, %16 : vector<64x1xf32>
    %18 = math.rsqrt %17 : vector<64x1xf32>
    %19 = vector.broadcast %18 : vector<64x1xf32> to vector<64x32xf32>
    %20 = arith.mulf %15, %19 : vector<64x32xf32>
    %21 = vector.broadcast %1 : vector<1x32xf32> to vector<64x32xf32>
    %22 = arith.mulf %20, %21 : vector<64x32xf32>
    %23 = vector.broadcast %2 : vector<1x32xf32> to vector<64x32xf32>
    %24 = arith.addf %22, %23 : vector<64x32xf32>
    %25 = arith.truncf %24 : vector<64x32xf32> to vector<64x32xbf16>
    %c0_9 = arith.constant 0 : index
    %c0_10 = arith.constant 0 : index
    %26 = vector.load %arg4[%c0_9, %c0_10] : memref<32x96xbf16, #tpu.memory_space<vmem>>, vector<32x96xbf16>
    %cst_11 = arith.constant dense<0.000000e+00> : vector<64x96xf32>
    %27 = tpu.matmul %25, %26, %cst_11 {dimension_numbers = #tpu.dot_dimension_numbers<[1], [0], [0], [1], [0, 0, 1, 1], [], []>} : vector<64x32xbf16>, vector<32x96xbf16>, vector<64x96xf32> -> vector<64x96xf32>
    %c0_12 = arith.constant 0 : index
    %c0_13 = arith.constant 0 : index
    %28 = vector.load %arg5[%c0_12, %c0_13] : memref<1x96xf32, #tpu.memory_space<vmem>>, vector<1x96xf32>
    %29 = vector.broadcast %28 : vector<1x96xf32> to vector<64x96xf32>
    %30 = arith.addf %27, %29 : vector<64x96xf32>
    %31 = arith.truncf %30 : vector<64x96xf32> to vector<64x96xbf16>
    %32 = vector.extract_strided_slice %31 {offsets = [0, 0], sizes = [64, 8], strides = [1, 1]} : vector<64x96xbf16> to vector<64x8xbf16>
    %33 = vector.extract_strided_slice %31 {offsets = [0, 32], sizes = [64, 8], strides = [1, 1]} : vector<64x96xbf16> to vector<64x8xbf16>
    %34 = vector.extract_strided_slice %31 {offsets = [0, 64], sizes = [64, 8], strides = [1, 1]} : vector<64x96xbf16> to vector<64x8xbf16>
    "tpu.trace_start"() <{level = 10 : i32, message = "qd,kd->qk"}> : () -> ()
    %cst_14 = arith.constant dense<0.000000e+00> : vector<64x64xf32>
    %35 = tpu.matmul %32, %33, %cst_14 {dimension_numbers = #tpu.dot_dimension_numbers<[1], [1], [0], [0], [0, 0, 1, 0], [], []>} : vector<64x8xbf16>, vector<64x8xbf16>, vector<64x64xf32> -> vector<64x64xf32>
    "tpu.trace_stop"() : () -> ()
    %cst_15 = arith.constant dense<0xFF800000> : vector<64xf32>
    %36 = vector.multi_reduction <maximumf>, %35, %cst_15 [1] : vector<64x64xf32> to vector<64xf32>
    %37 = vector.shape_cast %36 : vector<64xf32> to vector<64x1xf32>
    %38 = vector.broadcast %37 : vector<64x1xf32> to vector<64x64xf32>
    %39 = arith.subf %35, %38 : vector<64x64xf32>
    %40 = math.exp %39 : vector<64x64xf32>
    %cst_16 = arith.constant dense<0.000000e+00> : vector<64xf32>
    %41 = vector.multi_reduction <add>, %40, %cst_16 [1] : vector<64x64xf32> to vector<64xf32>
    %42 = vector.shape_cast %41 : vector<64xf32> to vector<64x1xf32>
    %43 = tpu.reciprocal %42 {approx = true} : vector<64x1xf32> -> vector<64x1xf32>
    %44 = arith.truncf %40 : vector<64x64xf32> to vector<64x64xbf16>
    %cst_17 = arith.constant dense<0.000000e+00> : vector<64x8xf32>
    %45 = tpu.matmul %44, %34, %cst_17 {dimension_numbers = #tpu.dot_dimension_numbers<[1], [0], [0], [1], [0, 0, 1, 1], [], []>} : vector<64x64xbf16>, vector<64x8xbf16>, vector<64x8xf32> -> vector<64x8xf32>
    %46 = vector.broadcast %43 : vector<64x1xf32> to vector<64x8xf32>
    %47 = arith.mulf %45, %46 : vector<64x8xf32>
    %c0_18 = arith.constant 0 : index
    %c0_19 = arith.constant 0 : index
    %48 = vector.load %arg15[%c0_18, %c0_19] : memref<64x32xf32, #tpu.memory_space<vmem>>, vector<64x8xf32>
    tpu.vector_store %arg15[%c0_18, %c0_19], %47 {strides = array<i32>} : memref<64x32xf32, #tpu.memory_space<vmem>>, vector<64x8xf32>,
    %49 = vector.extract_strided_slice %31 {offsets = [0, 8], sizes = [64, 8], strides = [1, 1]} : vector<64x96xbf16> to vector<64x8xbf16>
    %50 = vector.extract_strided_slice %31 {offsets = [0, 40], sizes = [64, 8], strides = [1, 1]} : vector<64x96xbf16> to vector<64x8xbf16>
    %51 = vector.extract_strided_slice %31 {offsets = [0, 72], sizes = [64, 8], strides = [1, 1]} : vector<64x96xbf16> to vector<64x8xbf16>
    "tpu.trace_start"() <{level = 10 : i32, message = "qd,kd->qk"}> : () -> ()
    %cst_20 = arith.constant dense<0.000000e+00> : vector<64x64xf32>
    %52 = tpu.matmul %49, %50, %cst_20 {dimension_numbers = #tpu.dot_dimension_numbers<[1], [1], [0], [0], [0, 0, 1, 0], [], []>} : vector<64x8xbf16>, vector<64x8xbf16>, vector<64x64xf32> -> vector<64x64xf32>
    "tpu.trace_stop"() : () -> ()
    %cst_21 = arith.constant dense<0xFF800000> : vector<64xf32>
    %53 = vector.multi_reduction <maximumf>, %52, %cst_21 [1] : vector<64x64xf32> to vector<64xf32>
    %54 = vector.shape_cast %53 : vector<64xf32> to vector<64x1xf32>
    %55 = vector.broadcast %54 : vector<64x1xf32> to vector<64x64xf32>
    %56 = arith.subf %52, %55 : vector<64x64xf32>
    %57 = math.exp %56 : vector<64x64xf32>
    %cst_22 = arith.constant dense<0.000000e+00> : vector<64xf32>
    %58 = vector.multi_reduction <add>, %57, %cst_22 [1] : vector<64x64xf32> to vector<64xf32>
    %59 = vector.shape_cast %58 : vector<64xf32> to vector<64x1xf32>
    %60 = tpu.reciprocal %59 {approx = true} : vector<64x1xf32> -> vector<64x1xf32>
    %61 = arith.truncf %57 : vector<64x64xf32> to vector<64x64xbf16>
    %cst_23 = arith.constant dense<0.000000e+00> : vector<64x8xf32>
    %62 = tpu.matmul %61, %51, %cst_23 {dimension_numbers = #tpu.dot_dimension_numbers<[1], [0], [0], [1], [0, 0, 1, 1], [], []>} : vector<64x64xbf16>, vector<64x8xbf16>, vector<64x8xf32> -> vector<64x8xf32>
    %63 = vector.broadcast %60 : vector<64x1xf32> to vector<64x8xf32>
    %64 = arith.mulf %62, %63 : vector<64x8xf32>
    %c0_24 = arith.constant 0 : index
    %c8 = arith.constant 8 : index
    %65 = vector.load %arg15[%c0_24, %c8] : memref<64x32xf32, #tpu.memory_space<vmem>>, vector<64x8xf32>
    tpu.vector_store %arg15[%c0_24, %c8], %64 {strides = array<i32>} : memref<64x32xf32, #tpu.memory_space<vmem>>, vector<64x8xf32>,
    %66 = vector.extract_strided_slice %31 {offsets = [0, 16], sizes = [64, 8], strides = [1, 1]} : vector<64x96xbf16> to vector<64x8xbf16>
    %67 = vector.extract_strided_slice %31 {offsets = [0, 48], sizes = [64, 8], strides = [1, 1]} : vector<64x96xbf16> to vector<64x8xbf16>
    %68 = vector.extract_strided_slice %31 {offsets = [0, 80], sizes = [64, 8], strides = [1, 1]} : vector<64x96xbf16> to vector<64x8xbf16>
    "tpu.trace_start"() <{level = 10 : i32, message = "qd,kd->qk"}> : () -> ()
    %cst_25 = arith.constant dense<0.000000e+00> : vector<64x64xf32>
    %69 = tpu.matmul %66, %67, %cst_25 {dimension_numbers = #tpu.dot_dimension_numbers<[1], [1], [0], [0], [0, 0, 1, 0], [], []>} : vector<64x8xbf16>, vector<64x8xbf16>, vector<64x64xf32> -> vector<64x64xf32>
    "tpu.trace_stop"() : () -> ()
    %cst_26 = arith.constant dense<0xFF800000> : vector<64xf32>
    %70 = vector.multi_reduction <maximumf>, %69, %cst_26 [1] : vector<64x64xf32> to vector<64xf32>
    %71 = vector.shape_cast %70 : vector<64xf32> to vector<64x1xf32>
    %72 = vector.broadcast %71 : vector<64x1xf32> to vector<64x64xf32>
    %73 = arith.subf %69, %72 : vector<64x64xf32>
    %74 = math.exp %73 : vector<64x64xf32>
    %cst_27 = arith.constant dense<0.000000e+00> : vector<64xf32>
    %75 = vector.multi_reduction <add>, %74, %cst_27 [1] : vector<64x64xf32> to vector<64xf32>
    %76 = vector.shape_cast %75 : vector<64xf32> to vector<64x1xf32>
    %77 = tpu.reciprocal %76 {approx = true} : vector<64x1xf32> -> vector<64x1xf32>
    %78 = arith.truncf %74 : vector<64x64xf32> to vector<64x64xbf16>
    %cst_28 = arith.constant dense<0.000000e+00> : vector<64x8xf32>
    %79 = tpu.matmul %78, %68, %cst_28 {dimension_numbers = #tpu.dot_dimension_numbers<[1], [0], [0], [1], [0, 0, 1, 1], [], []>} : vector<64x64xbf16>, vector<64x8xbf16>, vector<64x8xf32> -> vector<64x8xf32>
    %80 = vector.broadcast %77 : vector<64x1xf32> to vector<64x8xf32>
    %81 = arith.mulf %79, %80 : vector<64x8xf32>
    %c0_29 = arith.constant 0 : index
    %c16 = arith.constant 16 : index
    %82 = vector.load %arg15[%c0_29, %c16] : memref<64x32xf32, #tpu.memory_space<vmem>>, vector<64x8xf32>
    tpu.vector_store %arg15[%c0_29, %c16], %81 {strides = array<i32>} : memref<64x32xf32, #tpu.memory_space<vmem>>, vector<64x8xf32>,
    %83 = vector.extract_strided_slice %31 {offsets = [0, 24], sizes = [64, 8], strides = [1, 1]} : vector<64x96xbf16> to vector<64x8xbf16>
    %84 = vector.extract_strided_slice %31 {offsets = [0, 56], sizes = [64, 8], strides = [1, 1]} : vector<64x96xbf16> to vector<64x8xbf16>
    %85 = vector.extract_strided_slice %31 {offsets = [0, 88], sizes = [64, 8], strides = [1, 1]} : vector<64x96xbf16> to vector<64x8xbf16>
    "tpu.trace_start"() <{level = 10 : i32, message = "qd,kd->qk"}> : () -> ()
    %cst_30 = arith.constant dense<0.000000e+00> : vector<64x64xf32>
    %86 = tpu.matmul %83, %84, %cst_30 {dimension_numbers = #tpu.dot_dimension_numbers<[1], [1], [0], [0], [0, 0, 1, 0], [], []>} : vector<64x8xbf16>, vector<64x8xbf16>, vector<64x64xf32> -> vector<64x64xf32>
    "tpu.trace_stop"() : () -> ()
    %cst_31 = arith.constant dense<0xFF800000> : vector<64xf32>
    %87 = vector.multi_reduction <maximumf>, %86, %cst_31 [1] : vector<64x64xf32> to vector<64xf32>
    %88 = vector.shape_cast %87 : vector<64xf32> to vector<64x1xf32>
    %89 = vector.broadcast %88 : vector<64x1xf32> to vector<64x64xf32>
    %90 = arith.subf %86, %89 : vector<64x64xf32>
    %91 = math.exp %90 : vector<64x64xf32>
    %cst_32 = arith.constant dense<0.000000e+00> : vector<64xf32>
    %92 = vector.multi_reduction <add>, %91, %cst_32 [1] : vector<64x64xf32> to vector<64xf32>
    %93 = vector.shape_cast %92 : vector<64xf32> to vector<64x1xf32>
    %94 = tpu.reciprocal %93 {approx = true} : vector<64x1xf32> -> vector<64x1xf32>
    %95 = arith.truncf %91 : vector<64x64xf32> to vector<64x64xbf16>
    %cst_33 = arith.constant dense<0.000000e+00> : vector<64x8xf32>
    %96 = tpu.matmul %95, %85, %cst_33 {dimension_numbers = #tpu.dot_dimension_numbers<[1], [0], [0], [1], [0, 0, 1, 1], [], []>} : vector<64x64xbf16>, vector<64x8xbf16>, vector<64x8xf32> -> vector<64x8xf32>
    %97 = vector.broadcast %94 : vector<64x1xf32> to vector<64x8xf32>
    %98 = arith.mulf %96, %97 : vector<64x8xf32>
    %c0_34 = arith.constant 0 : index
    %c24 = arith.constant 24 : index
    %99 = vector.load %arg15[%c0_34, %c24] : memref<64x32xf32, #tpu.memory_space<vmem>>, vector<64x8xf32>
    tpu.vector_store %arg15[%c0_34, %c24], %98 {strides = array<i32>} : memref<64x32xf32, #tpu.memory_space<vmem>>, vector<64x8xf32>,
    %c0_35 = arith.constant 0 : index
    %c0_36 = arith.constant 0 : index
    %100 = vector.load %arg15[%c0_35, %c0_36] : memref<64x32xf32, #tpu.memory_space<vmem>>, vector<64x32xf32>
    %101 = arith.truncf %100 : vector<64x32xf32> to vector<64x32xbf16>
    %c0_37 = arith.constant 0 : index
    %c0_38 = arith.constant 0 : index
    %102 = vector.load %arg6[%c0_37, %c0_38] : memref<32x32xbf16, #tpu.memory_space<vmem>>, vector<32x32xbf16>
    %cst_39 = arith.constant dense<0.000000e+00> : vector<64x32xf32>
    %103 = tpu.matmul %101, %102, %cst_39 {dimension_numbers = #tpu.dot_dimension_numbers<[1], [0], [0], [1], [0, 0, 1, 1], [], []>} : vector<64x32xbf16>, vector<32x32xbf16>, vector<64x32xf32> -> vector<64x32xf32>
    %c0_40 = arith.constant 0 : index
    %c0_41 = arith.constant 0 : index
    %104 = vector.load %arg7[%c0_40, %c0_41] : memref<1x32xf32, #tpu.memory_space<vmem>>, vector<1x32xf32>
    %105 = vector.broadcast %104 : vector<1x32xf32> to vector<64x32xf32>
    %106 = arith.addf %103, %105 : vector<64x32xf32>
    %107 = arith.addf %106, %0 : vector<64x32xf32>
    %c0_42 = arith.constant 0 : index
    %c0_43 = arith.constant 0 : index
    %108 = vector.load %arg8[%c0_42, %c0_43] : memref<1x32xf32, #tpu.memory_space<vmem>>, vector<1x32xf32>
    %c0_44 = arith.constant 0 : index
    %c0_45 = arith.constant 0 : index
    %109 = vector.load %arg9[%c0_44, %c0_45] : memref<1x32xf32, #tpu.memory_space<vmem>>, vector<1x32xf32>
    %cst_46 = arith.constant dense<0.000000e+00> : vector<64xf32>
    %110 = vector.multi_reduction <add>, %107, %cst_46 [1] : vector<64x32xf32> to vector<64xf32>
    %111 = vector.shape_cast %110 : vector<64xf32> to vector<64x1xf32>
    %cst_47 = arith.constant 3.200000e+01 : f32
    %112 = vector.broadcast %cst_47 : f32 to vector<64x1xf32>
    %113 = arith.divf %111, %112 : vector<64x1xf32>
    %114 = vector.broadcast %113 : vector<64x1xf32> to vector<64x32xf32>
    %115 = arith.subf %107, %114 : vector<64x32xf32>
    %116 = arith.mulf %115, %115 : vector<64x32xf32>
    %cst_48 = arith.constant dense<0.000000e+00> : vector<64xf32>
    %117 = vector.multi_reduction <add>, %116, %cst_48 [1] : vector<64x32xf32> to vector<64xf32>
    %118 = vector.shape_cast %117 : vector<64xf32> to vector<64x1xf32>
    %cst_49 = arith.constant 3.200000e+01 : f32
    %119 = vector.broadcast %cst_49 : f32 to vector<64x1xf32>
    %120 = arith.divf %118, %119 : vector<64x1xf32>
    %121 = vector.broadcast %113 : vector<64x1xf32> to vector<64x32xf32>
    %122 = arith.subf %107, %121 : vector<64x32xf32>
    %cst_50 = arith.constant 9.99999974E-6 : f32
    %123 = vector.broadcast %cst_50 : f32 to vector<64x1xf32>
    %124 = arith.addf %120, %123 : vector<64x1xf32>
    %125 = math.rsqrt %124 : vector<64x1xf32>
    %126 = vector.broadcast %125 : vector<64x1xf32> to vector<64x32xf32>
    %127 = arith.mulf %122, %126 : vector<64x32xf32>
    %128 = vector.broadcast %108 : vector<1x32xf32> to vector<64x32xf32>
    %129 = arith.mulf %127, %128 : vector<64x32xf32>
    %130 = vector.broadcast %109 : vector<1x32xf32> to vector<64x32xf32>
    %131 = arith.addf %129, %130 : vector<64x32xf32>
    %132 = arith.truncf %131 : vector<64x32xf32> to vector<64x32xbf16>
    %c0_51 = arith.constant 0 : index
    %c0_52 = arith.constant 0 : index
    %133 = vector.load %arg10[%c0_51, %c0_52] : memref<32x32xbf16, #tpu.memory_space<vmem>>, vector<32x32xbf16>
    %cst_53 = arith.constant dense<0.000000e+00> : vector<64x32xf32>
    %134 = tpu.matmul %132, %133, %cst_53 {dimension_numbers = #tpu.dot_dimension_numbers<[1], [0], [0], [1], [0, 0, 1, 1], [], []>} : vector<64x32xbf16>, vector<32x32xbf16>, vector<64x32xf32> -> vector<64x32xf32>
    %c0_54 = arith.constant 0 : index
    %c0_55 = arith.constant 0 : index
    %135 = vector.load %arg11[%c0_54, %c0_55] : memref<1x32xf32, #tpu.memory_space<vmem>>, vector<1x32xf32>
    %136 = vector.broadcast %135 : vector<1x32xf32> to vector<64x32xf32>
    %137 = arith.addf %134, %136 : vector<64x32xf32>
    %cst_56 = arith.constant 5.000000e-01 : f32
    %138 = vector.broadcast %cst_56 : f32 to vector<64x32xf32>
    %139 = arith.mulf %138, %137 : vector<64x32xf32>
    %cst_57 = arith.constant 0.707106769 : f32
    %140 = vector.broadcast %cst_57 : f32 to vector<64x32xf32>
    %141 = arith.mulf %137, %140 : vector<64x32xf32>
    %142 = math.erf %141 : vector<64x32xf32>
    %cst_58 = arith.constant 1.000000e+00 : f32
    %143 = vector.broadcast %cst_58 : f32 to vector<64x32xf32>
    %144 = arith.addf %143, %142 : vector<64x32xf32>
    %145 = arith.mulf %139, %144 : vector<64x32xf32>
    %146 = arith.truncf %145 : vector<64x32xf32> to vector<64x32xbf16>
    %c0_59 = arith.constant 0 : index
    %c0_60 = arith.constant 0 : index
    %147 = vector.load %arg12[%c0_59, %c0_60] : memref<32x32xbf16, #tpu.memory_space<vmem>>, vector<32x32xbf16>
    %cst_61 = arith.constant dense<0.000000e+00> : vector<64x32xf32>
    %148 = tpu.matmul %146, %147, %cst_61 {dimension_numbers = #tpu.dot_dimension_numbers<[1], [0], [0], [1], [0, 0, 1, 1], [], []>} : vector<64x32xbf16>, vector<32x32xbf16>, vector<64x32xf32> -> vector<64x32xf32>
    %c0_62 = arith.constant 0 : index
    %c0_63 = arith.constant 0 : index
    %149 = vector.load %arg13[%c0_62, %c0_63] : memref<1x32xf32, #tpu.memory_space<vmem>>, vector<1x32xf32>
    %150 = vector.broadcast %149 : vector<1x32xf32> to vector<64x32xf32>
    %151 = arith.addf %148, %150 : vector<64x32xf32>
    %152 = arith.addf %151, %107 : vector<64x32xf32>
    %c0_64 = arith.constant 0 : index
    %c0_65 = arith.constant 0 : index
    %153 = vector.load %arg14[%c0_64, %c0_65] : memref<64x32xf32, #tpu.memory_space<vmem>>, vector<64x32xf32>
    tpu.vector_store %arg14[%c0_64, %c0_65], %152 {strides = array<i32>} : memref<64x32xf32, #tpu.memory_space<vmem>>, vector<64x32xf32>,
    return
  }
  func.func @transform_0(%arg0: i32) -> (i32, i32) {
    %c0_i32 = arith.constant 0 : i32
    %c0_i32_0 = arith.constant 0 : i32
    return %arg0, %c0_i32 : i32, i32
  }
  func.func @transform_1(%arg0: i32) -> (i32, i32) {
    %c0_i32 = arith.constant 0 : i32
    %c0_i32_0 = arith.constant 0 : i32
    %c0_i32_1 = arith.constant 0 : i32
    return %c0_i32, %c0_i32_0 : i32, i32
  }
  func.func @transform_2(%arg0: i32) -> (i32, i32) {
    %c0_i32 = arith.constant 0 : i32
    %c0_i32_0 = arith.constant 0 : i32
    %c0_i32_1 = arith.constant 0 : i32
    return %c0_i32, %c0_i32_0 : i32, i32
  }
  func.func @transform_3(%arg0: i32) -> (i32, i32) {
    %c0_i32 = arith.constant 0 : i32
    %c0_i32_0 = arith.constant 0 : i32
    %c0_i32_1 = arith.constant 0 : i32
    return %c0_i32, %c0_i32_0 : i32, i32
  }
  func.func @transform_4(%arg0: i32) -> (i32, i32) {
    %c0_i32 = arith.constant 0 : i32
    %c0_i32_0 = arith.constant 0 : i32
    %c0_i32_1 = arith.constant 0 : i32
    return %c0_i32, %c0_i32_0 : i32, i32
  }
  func.func @transform_5(%arg0: i32) -> (i32, i32) {
    %c0_i32 = arith.constant 0 : i32
    %c0_i32_0 = arith.constant 0 : i32
    %c0_i32_1 = arith.constant 0 : i32
    return %c0_i32, %c0_i32_0 : i32, i32
  }
  func.func @transform_6(%arg0: i32) -> (i32, i32) {
    %c0_i32 = arith.constant 0 : i32
    %c0_i32_0 = arith.constant 0 : i32
    %c0_i32_1 = arith.constant 0 : i32
    return %c0_i32, %c0_i32_0 : i32, i32
  }
  func.func @transform_7(%arg0: i32) -> (i32, i32) {
    %c0_i32 = arith.constant 0 : i32
    %c0_i32_0 = arith.constant 0 : i32
    %c0_i32_1 = arith.constant 0 : i32
    return %c0_i32, %c0_i32_0 : i32, i32
  }
  func.func @transform_8(%arg0: i32) -> (i32, i32) {
    %c0_i32 = arith.constant 0 : i32
    %c0_i32_0 = arith.constant 0 : i32
    %c0_i32_1 = arith.constant 0 : i32
    return %c0_i32, %c0_i32_0 : i32, i32
  }
  func.func @transform_9(%arg0: i32) -> (i32, i32) {
    %c0_i32 = arith.constant 0 : i32
    %c0_i32_0 = arith.constant 0 : i32
    %c0_i32_1 = arith.constant 0 : i32
    return %c0_i32, %c0_i32_0 : i32, i32
  }
  func.func @transform_10(%arg0: i32) -> (i32, i32) {
    %c0_i32 = arith.constant 0 : i32
    %c0_i32_0 = arith.constant 0 : i32
    %c0_i32_1 = arith.constant 0 : i32
    return %c0_i32, %c0_i32_0 : i32, i32
  }
  func.func @transform_11(%arg0: i32) -> (i32, i32) {
    %c0_i32 = arith.constant 0 : i32
    %c0_i32_0 = arith.constant 0 : i32
    %c0_i32_1 = arith.constant 0 : i32
    return %c0_i32, %c0_i32_0 : i32, i32
  }
  func.func @transform_12(%arg0: i32) -> (i32, i32) {
    %c0_i32 = arith.constant 0 : i32
    %c0_i32_0 = arith.constant 0 : i32
    %c0_i32_1 = arith.constant 0 : i32
    return %c0_i32, %c0_i32_0 : i32, i32
  }
  func.func @transform_13(%arg0: i32) -> (i32, i32) {
    %c0_i32 = arith.constant 0 : i32
    %c0_i32_0 = arith.constant 0 : i32
    return %arg0, %c0_i32 : i32, i32
  }
}

</mosaic_0001>

<llo_original>
// kernel: tpu_custom_call.1
$region0: #{tpu_custom_call.1}
  #allocation0 [shape = 'u32[]', space=smem, size = 0x4, offset = 0x4, fixed_abs, tag = 'smem constant byte address 0x4 - core index']
  #allocation1 [shape = 'u32[72,128]{1,0:T(1,128)}', space=vmem, size = 0x9000, scoped, tag = 'internal scratch']
  #allocation2 [shape = 'f32[64,32]{1,0:T(8,128)}', space=vmem, size = 0x8000, scoped, tag = 'scratch operand']
  %s0 = inlined_call_operand.vmem [shape: f32[128,32], index: 0, kind: input, shape index: {}]
  %s1 = inlined_call_operand.vmem [shape: f32[1,32], index: 1, kind: input, shape index: {}]
  %s2 = inlined_call_operand.vmem [shape: f32[1,32], index: 2, kind: input, shape index: {}]
  %s3 = inlined_call_operand.vmem [shape: bf16[32,96], index: 3, kind: input, shape index: {}]
  %s4 = inlined_call_operand.vmem [shape: f32[1,96], index: 4, kind: input, shape index: {}]
  %s5 = inlined_call_operand.vmem [shape: bf16[32,32], index: 5, kind: input, shape index: {}]
  %s6 = inlined_call_operand.vmem [shape: f32[1,32], index: 6, kind: input, shape index: {}]
  %s7 = inlined_call_operand.vmem [shape: f32[1,32], index: 7, kind: input, shape index: {}]
  %s8 = inlined_call_operand.vmem [shape: f32[1,32], index: 8, kind: input, shape index: {}]
  %s9 = inlined_call_operand.vmem [shape: bf16[32,32], index: 9, kind: input, shape index: {}]
  %s10 = inlined_call_operand.vmem [shape: f32[1,32], index: 10, kind: input, shape index: {}]
  %s11 = inlined_call_operand.vmem [shape: bf16[32,32], index: 11, kind: input, shape index: {}]
  %s12 = inlined_call_operand.vmem [shape: f32[1,32], index: 12, kind: input, shape index: {}]
  %s13 = inlined_call_operand.vmem [shape: f32[128,32], index: 13, kind: output, shape index: {}]
  %s14 = sld [smem:[#allocation0]]
  $region85: #{tpu_custom_call.1} parent=0
    _
  %s16 = ssub.s32 1, %s14
  %s17 = scalar_select 0, %s16, %s14
  loop: start=0, step=1, limit=4
  $region2: #{tpu_custom_call.1} parent=0 // loop_pre_header
    _
  $region3: #{tpu_custom_call.1} parent=0 // loop_header
    %s19 = sphi 0, %s23
    %p20 = scmp.ge.s32.totalorder %s19, 4
    %s29 = sphi 0, %s31
    %s32 = sphi 0, %s29
    %s33 = sphi 0, %s32
    %s49 = sphi 0, %s33
    %s53 = sphi 0, %s53
    %s55 = sphi 0, %s53
    %s56 = sphi 0, %s55
    %s70 = sphi 0, %s56
    %s74 = sphi 0, %s74
    %s76 = sphi 0, %s74
    %s77 = sphi 0, %s76
    %s91 = sphi 0, %s77
    %s95 = sphi 0, %s95
    %s97 = sphi 0, %s95
    %s98 = sphi 0, %s97
    %s112 = sphi 0, %s98
    %s116 = sphi 0, %s116
    %s118 = sphi 0, %s116
    %s119 = sphi 0, %s118
    %s133 = sphi 0, %s119
    %s137 = sphi 0, %s137
    %s139 = sphi 0, %s137
    %s140 = sphi 0, %s139
    %s154 = sphi 0, %s140
    %s158 = sphi 0, %s158
    %s160 = sphi 0, %s158
    %s161 = sphi 0, %s160
    %s175 = sphi 0, %s161
    %s179 = sphi 0, %s179
    %s181 = sphi 0, %s179
    %s182 = sphi 0, %s181
    %s196 = sphi 0, %s182
    %s200 = sphi 0, %s200
    %s202 = sphi 0, %s200
    %s203 = sphi 0, %s202
    %s217 = sphi 0, %s203
    %s221 = sphi 0, %s221
    %s223 = sphi 0, %s221
    %s224 = sphi 0, %s223
    %s238 = sphi 0, %s224
    %s242 = sphi 0, %s242
    %s244 = sphi 0, %s242
    %s245 = sphi 0, %s244
    %s259 = sphi 0, %s245
    %s263 = sphi 0, %s263
    %s265 = sphi 0, %s263
    %s266 = sphi 0, %s265
    %s280 = sphi 0, %s266
    %s284 = sphi 0, %s284
    %s286 = sphi 0, %s284
    %s287 = sphi 0, %s286
    %s301 = sphi 0, %s287
    %s307 = sphi 0, %s309
    %s310 = sphi 0, %s307
    %s311 = sphi 0, %s310
    %s327 = sphi 0, %s311
  $region4: #{tpu_custom_call.1} parent=0 // loop_header_branch
    %22 = sbr.rel (%p20) target = $region8
  $region5: #{tpu_custom_call.1} parent=0 // loop_body
    %s24 = ssub.s32 %s19, 1
    %s25 = ssub.s32 %s19, 2
    %s26 = sadd.s32 %s19, 1
    %s27 = ssub.s32 %s19, %s26
    %p28 = scmp.eq.s32.totalorder %s27, 0
    %s30 = sadd.s32 %s29, 1
    %s31 = scalar_select %p28, %s29, %s30
    %p34 = pneg %p28
    %p35 = scmp.eq.s32.totalorder %s19, 1
    %p36 = por %p34, %p35
    %p37 = scmp.ne.s32.totalorder %s29, %s32
    %p38 = scmp.eq.s32.totalorder %s19, 0
    %p39 = por %p37, %p38
    %p40 = scmp.ne.s32.totalorder %s29, %s32
    %p41 = scmp.eq.s32.totalorder %s24, 1
    %p42 = por %p40, %p41
    %p43 = scmp.ne.s32.totalorder %s32, %s33
    %p44 = scmp.eq.s32.totalorder %s24, 0
    %p45 = por %p43, %p44
    %p46 = scmp.ne.s32.totalorder %s32, %s33
    %p47 = scmp.eq.s32.totalorder %s25, 1
    %p48 = por %p46, %p47
    %p50 = scmp.ne.s32.totalorder %s33, %s49
    %p51 = scmp.eq.s32.totalorder %s25, 0
    %p52 = por %p50, %p51
    %s54 = sadd.s32 %s53, 1
    %p57 = scmp.eq.s32.totalorder %s19, 1
    %p58 = scmp.ne.s32.totalorder %s53, %s55
    %p59 = scmp.eq.s32.totalorder %s19, 0
    %p60 = por %p58, %p59
    %p61 = scmp.ne.s32.totalorder %s53, %s55
    %p62 = scmp.eq.s32.totalorder %s24, 1
    %p63 = por %p61, %p62
    %p64 = scmp.ne.s32.totalorder %s55, %s56
    %p65 = scmp.eq.s32.totalorder %s24, 0
    %p66 = por %p64, %p65
    %p67 = scmp.ne.s32.totalorder %s55, %s56
    %p68 = scmp.eq.s32.totalorder %s25, 1
    %p69 = por %p67, %p68
    %p71 = scmp.ne.s32.totalorder %s56, %s70
    %p72 = scmp.eq.s32.totalorder %s25, 0
    %p73 = por %p71, %p72
    %s75 = sadd.s32 %s74, 1
    %p78 = scmp.eq.s32.totalorder %s19, 1
    %p79 = scmp.ne.s32.totalorder %s74, %s76
    %p80 = scmp.eq.s32.totalorder %s19, 0
    %p81 = por %p79, %p80
    %p82 = scmp.ne.s32.totalorder %s74, %s76
    %p83 = scmp.eq.s32.totalorder %s24, 1
    %p84 = por %p82, %p83
    %p85 = scmp.ne.s32.totalorder %s76, %s77
    %p86 = scmp.eq.s32.totalorder %s24, 0
    %p87 = por %p85, %p86
    %p88 = scmp.ne.s32.totalorder %s76, %s77
    %p89 = scmp.eq.s32.totalorder %s25, 1
    %p90 = por %p88, %p89
    %p92 = scmp.ne.s32.totalorder %s77, %s91
    %p93 = scmp.eq.s32.totalorder %s25, 0
    %p94 = por %p92, %p93
    %s96 = sadd.s32 %s95, 1
    %p99 = scmp.eq.s32.totalorder %s19, 1
    %p100 = scmp.ne.s32.totalorder %s95, %s97
    %p101 = scmp.eq.s32.totalorder %s19, 0
    %p102 = por %p100, %p101
    %p103 = scmp.ne.s32.totalorder %s95, %s97
    %p104 = scmp.eq.s32.totalorder %s24, 1
    %p105 = por %p103, %p104
    %p106 = scmp.ne.s32.totalorder %s97, %s98
    %p107 = scmp.eq.s32.totalorder %s24, 0
    %p108 = por %p106, %p107
    %p109 = scmp.ne.s32.totalorder %s97, %s98
    %p110 = scmp.eq.s32.totalorder %s25, 1
    %p111 = por %p109, %p110
    %p113 = scmp.ne.s32.totalorder %s98, %s112
    %p114 = scmp.eq.s32.totalorder %s25, 0
    %p115 = por %p113, %p114
    %s117 = sadd.s32 %s116, 1
    %p120 = scmp.eq.s32.totalorder %s19, 1
    %p121 = scmp.ne.s32.totalorder %s116, %s118
    %p122 = scmp.eq.s32.totalorder %s19, 0
    %p123 = por %p121, %p122
    %p124 = scmp.ne.s32.totalorder %s116, %s118
    %p125 = scmp.eq.s32.totalorder %s24, 1
    %p126 = por %p124, %p125
    %p127 = scmp.ne.s32.totalorder %s118, %s119
    %p128 = scmp.eq.s32.totalorder %s24, 0
    %p129 = por %p127, %p128
    %p130 = scmp.ne.s32.totalorder %s118, %s119
    %p131 = scmp.eq.s32.totalorder %s25, 1
    %p132 = por %p130, %p131
    %p134 = scmp.ne.s32.totalorder %s119, %s133
    %p135 = scmp.eq.s32.totalorder %s25, 0
    %p136 = por %p134, %p135
    %s138 = sadd.s32 %s137, 1
    %p141 = scmp.eq.s32.totalorder %s19, 1
    %p142 = scmp.ne.s32.totalorder %s137, %s139
    %p143 = scmp.eq.s32.totalorder %s19, 0
    %p144 = por %p142, %p143
    %p145 = scmp.ne.s32.totalorder %s137, %s139
    %p146 = scmp.eq.s32.totalorder %s24, 1
    %p147 = por %p145, %p146
    %p148 = scmp.ne.s32.totalorder %s139, %s140
    %p149 = scmp.eq.s32.totalorder %s24, 0
    %p150 = por %p148, %p149
    %p151 = scmp.ne.s32.totalorder %s139, %s140
    %p152 = scmp.eq.s32.totalorder %s25, 1
    %p153 = por %p151, %p152
    %p155 = scmp.ne.s32.totalorder %s140, %s154
    %p156 = scmp.eq.s32.totalorder %s25, 0
    %p157 = por %p155, %p156
    %s159 = sadd.s32 %s158, 1
    %p162 = scmp.eq.s32.totalorder %s19, 1
    %p163 = scmp.ne.s32.totalorder %s158, %s160
    %p164 = scmp.eq.s32.totalorder %s19, 0
    %p165 = por %p163, %p164
    %p166 = scmp.ne.s32.totalorder %s158, %s160
    %p167 = scmp.eq.s32.totalorder %s24, 1
    %p168 = por %p166, %p167
    %p169 = scmp.ne.s32.totalorder %s160, %s161
    %p170 = scmp.eq.s32.totalorder %s24, 0
    %p171 = por %p169, %p170
    %p172 = scmp.ne.s32.totalorder %s160, %s161
    %p173 = scmp.eq.s32.totalorder %s25, 1
    %p174 = por %p172, %p173
    %p176 = scmp.ne.s32.totalorder %s161, %s175
    %p177 = scmp.eq.s32.totalorder %s25, 0
    %p178 = por %p176, %p177
    %s180 = sadd.s32 %s179, 1
    %p183 = scmp.eq.s32.totalorder %s19, 1
    %p184 = scmp.ne.s32.totalorder %s179, %s181
    %p185 = scmp.eq.s32.totalorder %s19, 0
    %p186 = por %p184, %p185
    %p187 = scmp.ne.s32.totalorder %s179, %s181
    %p188 = scmp.eq.s32.totalorder %s24, 1
    %p189 = por %p187, %p188
    %p190 = scmp.ne.s32.totalorder %s181, %s182
    %p191 = scmp.eq.s32.totalorder %s24, 0
    %p192 = por %p190, %p191
    %p193 = scmp.ne.s32.totalorder %s181, %s182
    %p194 = scmp.eq.s32.totalorder %s25, 1
    %p195 = por %p193, %p194
    %p197 = scmp.ne.s32.totalorder %s182, %s196
    %p198 = scmp.eq.s32.totalorder %s25, 0
    %p199 = por %p197, %p198
    %s201 = sadd.s32 %s200, 1
    %p204 = scmp.eq.s32.totalorder %s19, 1
    %p205 = scmp.ne.s32.totalorder %s200, %s202
    %p206 = scmp.eq.s32.totalorder %s19, 0
    %p207 = por %p205, %p206
    %p208 = scmp.ne.s32.totalorder %s200, %s202
    %p209 = scmp.eq.s32.totalorder %s24, 1
    %p210 = por %p208, %p209
    %p211 = scmp.ne.s32.totalorder %s202, %s203
    %p212 = scmp.eq.s32.totalorder %s24, 0
    %p213 = por %p211, %p212
    %p214 = scmp.ne.s32.totalorder %s202, %s203
    %p215 = scmp.eq.s32.totalorder %s25, 1
    %p216 = por %p214, %p215
    %p218 = scmp.ne.s32.totalorder %s203, %s217
    %p219 = scmp.eq.s32.totalorder %s25, 0
    %p220 = por %p218, %p219
    %s222 = sadd.s32 %s221, 1
    %p225 = scmp.eq.s32.totalorder %s19, 1
    %p226 = scmp.ne.s32.totalorder %s221, %s223
    %p227 = scmp.eq.s32.totalorder %s19, 0
    %p228 = por %p226, %p227
    %p229 = scmp.ne.s32.totalorder %s221, %s223
    %p230 = scmp.eq.s32.totalorder %s24, 1
    %p231 = por %p229, %p230
    %p232 = scmp.ne.s32.totalorder %s223, %s224
    %p233 = scmp.eq.s32.totalorder %s24, 0
    %p234 = por %p232, %p233
    %p235 = scmp.ne.s32.totalorder %s223, %s224
    %p236 = scmp.eq.s32.totalorder %s25, 1
    %p237 = por %p235, %p236
    %p239 = scmp.ne.s32.totalorder %s224, %s238
    %p240 = scmp.eq.s32.totalorder %s25, 0
    %p241 = por %p239, %p240
    %s243 = sadd.s32 %s242, 1
    %p246 = scmp.eq.s32.totalorder %s19, 1
    %p247 = scmp.ne.s32.totalorder %s242, %s244
    %p248 = scmp.eq.s32.totalorder %s19, 0
    %p249 = por %p247, %p248
    %p250 = scmp.ne.s32.totalorder %s242, %s244
    %p251 = scmp.eq.s32.totalorder %s24, 1
    %p252 = por %p250, %p251
    %p253 = scmp.ne.s32.totalorder %s244, %s245
    %p254 = scmp.eq.s32.totalorder %s24, 0
    %p255 = por %p253, %p254
    %p256 = scmp.ne.s32.totalorder %s244, %s245
    %p257 = scmp.eq.s32.totalorder %s25, 1
    %p258 = por %p256, %p257
    %p260 = scmp.ne.s32.totalorder %s245, %s259
    %p261 = scmp.eq.s32.totalorder %s25, 0
    %p262 = por %p260, %p261
    %s264 = sadd.s32 %s263, 1
    %p267 = scmp.eq.s32.totalorder %s19, 1
    %p268 = scmp.ne.s32.totalorder %s263, %s265
    %p269 = scmp.eq.s32.totalorder %s19, 0
    %p270 = por %p268, %p269
    %p271 = scmp.ne.s32.totalorder %s263, %s265
    %p272 = scmp.eq.s32.totalorder %s24, 1
    %p273 = por %p271, %p272
    %p274 = scmp.ne.s32.totalorder %s265, %s266
    %p275 = scmp.eq.s32.totalorder %s24, 0
    %p276 = por %p274, %p275
    %p277 = scmp.ne.s32.totalorder %s265, %s266
    %p278 = scmp.eq.s32.totalorder %s25, 1
    %p279 = por %p277, %p278
    %p281 = scmp.ne.s32.totalorder %s266, %s280
    %p282 = scmp.eq.s32.totalorder %s25, 0
    %p283 = por %p281, %p282
    %s285 = sadd.s32 %s284, 1
    %p288 = scmp.eq.s32.totalorder %s19, 1
    %p289 = scmp.ne.s32.totalorder %s284, %s286
    %p290 = scmp.eq.s32.totalorder %s19, 0
    %p291 = por %p289, %p290
    %p292 = scmp.ne.s32.totalorder %s284, %s286
    %p293 = scmp.eq.s32.totalorder %s24, 1
    %p294 = por %p292, %p293
    %p295 = scmp.ne.s32.totalorder %s286, %s287
    %p296 = scmp.eq.s32.totalorder %s24, 0
    %p297 = por %p295, %p296
    %p298 = scmp.ne.s32.totalorder %s286, %s287
    %p299 = scmp.eq.s32.totalorder %s25, 1
    %p300 = por %p298, %p299
    %p302 = scmp.ne.s32.totalorder %s287, %s301
    %p303 = scmp.eq.s32.totalorder %s25, 0
    %p304 = por %p302, %p303
    %s305 = ssub.s32 %s19, %s26
    %p306 = scmp.eq.s32.totalorder %s305, 0
    %s308 = sadd.s32 %s307, 1
    %s309 = scalar_select %p306, %s307, %s308
    %p312 = pneg %p306
    %p313 = scmp.eq.s32.totalorder %s19, 1
    %p314 = por %p312, %p313
    %p315 = scmp.ne.s32.totalorder %s307, %s310
    %p316 = scmp.eq.s32.totalorder %s19, 0
    %p317 = por %p315, %p316
    %p318 = scmp.ne.s32.totalorder %s307, %s310
    %p319 = scmp.eq.s32.totalorder %s24, 1
    %p320 = por %p318, %p319
    %p321 = scmp.ne.s32.totalorder %s310, %s311
    %p322 = scmp.eq.s32.totalorder %s24, 0
    %p323 = por %p321, %p322
    %p324 = scmp.ne.s32.totalorder %s310, %s311
    %p325 = scmp.eq.s32.totalorder %s25, 1
    %p326 = por %p324, %p325
    %p328 = scmp.ne.s32.totalorder %s311, %s327
    %p329 = scmp.eq.s32.totalorder %s25, 0
    %p330 = por %p328, %p329
    %p331 = scmp.le.s32.totalorder 1, %s19
    %p332 = scmp.lt.s32.totalorder %s19, 3
    %p333 = pnand %p331, %p332
    %p334 = pneg %p333
    // Predicated region
    $region9: #{tpu_custom_call.1} parent=5 // pred_check
      _
    $region10: #{tpu_custom_call.1} parent=5 // pred_check_branch
      %336 = sbr.rel (%p333) target = $region12
    $region11: #{tpu_custom_call.1} parent=5 // pred_region
      %s337 = ssub.s32 %s19, 1
      // Predicated region
      $region13: #{tpu_custom_call.1} parent=11 // pred_check
        %p338 = pneg %p66
      $region14: #{tpu_custom_call.1} parent=11 // pred_check_branch
        %340 = sbr.rel (%p338) target = $region16
      $region15: #{tpu_custom_call.1} parent=11 // pred_region
        _
      $region16: #{tpu_custom_call.1} parent=11 // pred_fallthru
        _
      // Predicated region
      $region17: #{tpu_custom_call.1} parent=11 // pred_check
        %p341 = pneg %p87
      $region18: #{tpu_custom_call.1} parent=11 // pred_check_branch
        %343 = sbr.rel (%p341) target = $region20
      $region19: #{tpu_custom_call.1} parent=11 // pred_region
        _
      $region20: #{tpu_custom_call.1} parent=11 // pred_fallthru
        _
      // Predicated region
      $region21: #{tpu_custom_call.1} parent=11 // pred_check
        %p344 = pneg %p108
      $region22: #{tpu_custom_call.1} parent=11 // pred_check_branch
        %346 = sbr.rel (%p344) target = $region24
      $region23: #{tpu_custom_call.1} parent=11 // pred_region
        _
      $region24: #{tpu_custom_call.1} parent=11 // pred_fallthru
        _
      // Predicated region
      $region25: #{tpu_custom_call.1} parent=11 // pred_check
        %p347 = pneg %p129
      $region26: #{tpu_custom_call.1} parent=11 // pred_check_branch
        %349 = sbr.rel (%p347) target = $region28
      $region27: #{tpu_custom_call.1} parent=11 // pred_region
        _
      $region28: #{tpu_custom_call.1} parent=11 // pred_fallthru
        _
      // Predicated region
      $region29: #{tpu_custom_call.1} parent=11 // pred_check
        %p350 = pneg %p150
      $region30: #{tpu_custom_call.1} parent=11 // pred_check_branch
        %352 = sbr.rel (%p350) target = $region32
      $region31: #{tpu_custom_call.1} parent=11 // pred_region
        _
      $region32: #{tpu_custom_call.1} parent=11 // pred_fallthru
        _
      // Predicated region
      $region33: #{tpu_custom_call.1} parent=11 // pred_check
        %p353 = pneg %p171
      $region34: #{tpu_custom_call.1} parent=11 // pred_check_branch
        %355 = sbr.rel (%p353) target = $region36
      $region35: #{tpu_custom_call.1} parent=11 // pred_region
        _
      $region36: #{tpu_custom_call.1} parent=11 // pred_fallthru
        _
      // Predicated region
      $region37: #{tpu_custom_call.1} parent=11 // pred_check
        %p356 = pneg %p192
      $region38: #{tpu_custom_call.1} parent=11 // pred_check_branch
        %358 = sbr.rel (%p356) target = $region40
      $region39: #{tpu_custom_call.1} parent=11 // pred_region
        _
      $region40: #{tpu_custom_call.1} parent=11 // pred_fallthru
        _
      // Predicated region
      $region41: #{tpu_custom_call.1} parent=11 // pred_check
        %p359 = pneg %p213
      $region42: #{tpu_custom_call.1} parent=11 // pred_check_branch
        %361 = sbr.rel (%p359) target = $region44
      $region43: #{tpu_custom_call.1} parent=11 // pred_region
        _
      $region44: #{tpu_custom_call.1} parent=11 // pred_fallthru
        _
      // Predicated region
      $region45: #{tpu_custom_call.1} parent=11 // pred_check
        %p362 = pneg %p234
      $region46: #{tpu_custom_call.1} parent=11 // pred_check_branch
        %364 = sbr.rel (%p362) target = $region48
      $region47: #{tpu_custom_call.1} parent=11 // pred_region
        _
      $region48: #{tpu_custom_call.1} parent=11 // pred_fallthru
        _
      // Predicated region
      $region49: #{tpu_custom_call.1} parent=11 // pred_check
        %p365 = pneg %p255
      $region50: #{tpu_custom_call.1} parent=11 // pred_check_branch
        %367 = sbr.rel (%p365) target = $region52
      $region51: #{tpu_custom_call.1} parent=11 // pred_region
        _
      $region52: #{tpu_custom_call.1} parent=11 // pred_fallthru
        _
      // Predicated region
      $region53: #{tpu_custom_call.1} parent=11 // pred_check
        %p368 = pneg %p276
      $region54: #{tpu_custom_call.1} parent=11 // pred_check_branch
        %370 = sbr.rel (%p368) target = $region56
      $region55: #{tpu_custom_call.1} parent=11 // pred_region
        _
      $region56: #{tpu_custom_call.1} parent=11 // pred_fallthru
        _
      // Predicated region
      $region57: #{tpu_custom_call.1} parent=11 // pred_check
        %p371 = pneg %p297
      $region58: #{tpu_custom_call.1} parent=11 // pred_check_branch
        %373 = sbr.rel (%p371) target = $region60
      $region59: #{tpu_custom_call.1} parent=11 // pred_region
        _
      $region60: #{tpu_custom_call.1} parent=11 // pred_fallthru
        _
    $region12: #{tpu_custom_call.1} parent=5 // pred_fallthru
      _
    %p374 = scmp.lt.s32.totalorder %s19, 2
    // Predicated region
    $region61: #{tpu_custom_call.1} parent=5 // pred_check
      %p375 = pneg %p374
    $region62: #{tpu_custom_call.1} parent=5 // pred_check_branch
      %377 = sbr.rel (%p375) target = $region64
    $region63: #{tpu_custom_call.1} parent=5 // pred_region
      // Predicated region
      $region65: #{tpu_custom_call.1} parent=63 // pred_check
        %p378 = pneg %p39
      $region66: #{tpu_custom_call.1} parent=63 // pred_check_branch
        %380 = sbr.rel (%p378) target = $region68
      $region67: #{tpu_custom_call.1} parent=63 // pred_region
        %s381 = smul.u32 8, %s19
        %p382 = scmp.lt.s32.totalorder %s381, 15
        %s383 = scalar_select %p382, %s381, 15
        %s384 = smul.addr %s383, 8
        %s385 = scalar_lea.vmem %s0, %s384
        %s386 = smul.u32 8, %s19
      $region68: #{tpu_custom_call.1} parent=63 // pred_fallthru
        _
    $region64: #{tpu_custom_call.1} parent=5 // pred_fallthru
      _
    %p387 = scmp.le.s32.totalorder 1, %s19
    %p388 = scmp.lt.s32.totalorder %s19, 3
    %p389 = pnand %p387, %p388
    %p390 = pneg %p389
    // Predicated region
    $region69: #{tpu_custom_call.1} parent=5 // pred_check
      _
    $region70: #{tpu_custom_call.1} parent=5 // pred_check_branch
      %392 = sbr.rel (%p389) target = $region72
    $region71: #{tpu_custom_call.1} parent=5 // pred_region
      %s393 = ssub.s32 %s19, 1
      %s394 = smul.u32 8, %s24
      %p395 = scmp.lt.s32.totalorder %s394, 15
      %s396 = scalar_select %p395, %s394, 15
      %s397 = smul.addr %s396, 8
      %s398 = scalar_lea.vmem %s0, %s397
      %p399 = pneg %p45
      %p400 = pneg %p42
      %p401 = pneg %p66
      %p402 = pneg %p63
      %p403 = pneg %p87
      %p404 = pneg %p84
      %p405 = pneg %p108
      %p406 = pneg %p105
      %p407 = pneg %p129
      %p408 = pneg %p126
      %p409 = pneg %p150
      %p410 = pneg %p147
      %p411 = pneg %p171
      %p412 = pneg %p168
      %p413 = pneg %p192
      %p414 = pneg %p189
      %p415 = pneg %p213
      %p416 = pneg %p210
      %p417 = pneg %p234
      %p418 = pneg %p231
      %p419 = pneg %p255
      %p420 = pneg %p252
      %p421 = pneg %p276
      %p422 = pneg %p273
      %p423 = pneg %p297
      %p424 = pneg %p294
      %p425 = pneg %p323
      %p426 = pneg %p320
      %s427 = smul.u32 8, %s24
      %p428 = scmp.lt.s32.totalorder %s427, 15
      %s429 = scalar_select %p428, %s427, 15
      %s430 = smul.addr %s429, 8
      %s431 = scalar_lea.vmem %s13, %s430
      %s432 = smul.u32 8, %s24
      %p433 = scmp.lt.s32.totalorder %s432, 15
      %s434 = scalar_select %p433, %s432, 15
      %s435 = smul.addr %s434, 8
      %s436 = scalar_lea.vmem %s0, %s435
      %s437 = smul.u32 8, %s24
      %s438 = smul.u32 8, %s24
      %p439 = scmp.lt.s32.totalorder %s438, 15
      %s440 = scalar_select %p439, %s438, 15
      %s441 = smul.addr %s440, 8
      %s442 = scalar_lea.vmem %s13, %s441
      %s443 = smul.u32 8, %s24
      %v445 = vld [vmem:[%s436] sm:$0xff]
      %v446 = vld [vmem:[%s436 + $0x8] sm:$0xff]
      %v447 = vld [vmem:[%s436 + $0x10] sm:$0xff]
      %v448 = vld [vmem:[%s436 + $0x18] sm:$0xff]
      %v449 = vld [vmem:[%s436 + $0x20] sm:$0xff]
      %v450 = vld [vmem:[%s436 + $0x28] sm:$0xff]
      %v451 = vld [vmem:[%s436 + $0x30] sm:$0xff]
      %v452 = vld [vmem:[%s436 + $0x38] sm:$0xff]
      %v453 = vld [vmem:[%s1] sm:$0x1]
      %v454 = vld [vmem:[%s2] sm:$0x1]
      %vm455 = vcmask 261120
      %v456 = vsel %vm455, %v445, 0.0
      %457 = vadd.xlane.f32.xlu0 %v456
      %v458 = vpop.xlane.xlu0 %457
      %v459 = vsel %vm455, %v446, 0.0
      %460 = vadd.xlane.f32.xlu0 %v459
      %v461 = vpop.xlane.xlu0 %460
      %v462 = vsel %vm455, %v447, 0.0
      %463 = vadd.xlane.f32.xlu0 %v462
      %v464 = vpop.xlane.xlu0 %463
      %v465 = vsel %vm455, %v448, 0.0
      %466 = vadd.xlane.f32.xlu0 %v465
      %v467 = vpop.xlane.xlu0 %466
      %v468 = vsel %vm455, %v449, 0.0
      %469 = vadd.xlane.f32.xlu0 %v468
      %v470 = vpop.xlane.xlu0 %469
      %v471 = vsel %vm455, %v450, 0.0
      %472 = vadd.xlane.f32.xlu0 %v471
      %v473 = vpop.xlane.xlu0 %472
      %v474 = vsel %vm455, %v451, 0.0
      %475 = vadd.xlane.f32.xlu0 %v474
      %v476 = vpop.xlane.xlu0 %475
      %v477 = vsel %vm455, %v452, 0.0
      %478 = vadd.xlane.f32.xlu0 %v477
      %v479 = vpop.xlane.xlu0 %478
      %v480 = vrcp.pop 32.0
      %v481 = vmul.f32 32.0, %v480
      %v482 = vsub.f32 1.0, %v481
      %v483 = vmul.f32 %v480, %v482
      %v484 = vadd.f32 %v480, %v483
      %vm485 = vweird.f32 %v480
      %v486 = vsel %vm485, %v480, %v484
      %v487 = vmul.f32 %v458, %v486
      %v488 = vmul.f32 %v461, %v486
      %v489 = vmul.f32 %v464, %v486
      %v490 = vmul.f32 %v467, %v486
      %v491 = vmul.f32 %v470, %v486
      %v492 = vmul.f32 %v473, %v486
      %v493 = vmul.f32 %v476, %v486
      %v494 = vmul.f32 %v479, %v486
      %v495 = vsub.f32 %v445, %v487
      %v496 = vsub.f32 %v446, %v488
      %v497 = vsub.f32 %v447, %v489
      %v498 = vsub.f32 %v448, %v490
      %v499 = vsub.f32 %v449, %v491
      %v500 = vsub.f32 %v450, %v492
      %v501 = vsub.f32 %v451, %v493
      %v502 = vsub.f32 %v452, %v494
      %v503 = vmul.f32 %v495, %v495
      %v504 = vmul.f32 %v496, %v496
      %v505 = vmul.f32 %v497, %v497
      %v506 = vmul.f32 %v498, %v498
      %v507 = vmul.f32 %v499, %v499
      %v508 = vmul.f32 %v500, %v500
      %v509 = vmul.f32 %v501, %v501
      %v510 = vmul.f32 %v502, %v502
      %v511 = vsel %vm455, %v503, 0.0
      %512 = vadd.xlane.f32.xlu0 %v511
      %v513 = vpop.xlane.xlu0 %512
      %v514 = vsel %vm455, %v504, 0.0
      %515 = vadd.xlane.f32.xlu0 %v514
      %v516 = vpop.xlane.xlu0 %515
      %v517 = vsel %vm455, %v505, 0.0
      %518 = vadd.xlane.f32.xlu0 %v517
      %v519 = vpop.xlane.xlu0 %518
      %v520 = vsel %vm455, %v506, 0.0
      %521 = vadd.xlane.f32.xlu0 %v520
      %v522 = vpop.xlane.xlu0 %521
      %v523 = vsel %vm455, %v507, 0.0
      %524 = vadd.xlane.f32.xlu0 %v523
      %v525 = vpop.xlane.xlu0 %524
      %v526 = vsel %vm455, %v508, 0.0
      %527 = vadd.xlane.f32.xlu0 %v526
      %v528 = vpop.xlane.xlu0 %527
      %v529 = vsel %vm455, %v509, 0.0
      %530 = vadd.xlane.f32.xlu0 %v529
      %v531 = vpop.xlane.xlu0 %530
      %v532 = vsel %vm455, %v510, 0.0
      %533 = vadd.xlane.f32.xlu0 %v532
      %v534 = vpop.xlane.xlu0 %533
      %v535 = vmul.f32 %v513, %v486
      %v536 = vmul.f32 %v516, %v486
      %v537 = vmul.f32 %v519, %v486
      %v538 = vmul.f32 %v522, %v486
      %v539 = vmul.f32 %v525, %v486
      %v540 = vmul.f32 %v528, %v486
      %v541 = vmul.f32 %v531, %v486
      %v542 = vmul.f32 %v534, %v486
      %v543 = vadd.f32 %v535, 1e-05
      %v544 = vadd.f32 %v536, 1e-05
      %v545 = vadd.f32 %v537, 1e-05
      %v546 = vadd.f32 %v538, 1e-05
      %v547 = vadd.f32 %v539, 1e-05
      %v548 = vadd.f32 %v540, 1e-05
      %v549 = vadd.f32 %v541, 1e-05
      %v550 = vadd.f32 %v542, 1e-05
      %v551 = vrsqrt.pop %v543
      %v552 = vmul.f32 %v551, %v543
      %v553 = vmul.f32 %v552, %v551
      %v554 = vmul.f32 0.5, %v553
      %v555 = vsub.f32 1.5, %v554
      %v556 = vmul.f32 %v551, %v555
      %vm557 = vweird.f32 %v543
      %vm558 = vweird.f32 %v551
      %vm559 = vmor %vm557, %vm558
      %v560 = vsel %vm559, %v551, %v556
      %v561 = vrsqrt.pop %v544
      %v562 = vmul.f32 %v561, %v544
      %v563 = vmul.f32 %v562, %v561
      %v564 = vmul.f32 0.5, %v563
      %v565 = vsub.f32 1.5, %v564
      %v566 = vmul.f32 %v561, %v565
      %vm567 = vweird.f32 %v544
      %vm568 = vweird.f32 %v561
      %vm569 = vmor %vm567, %vm568
      %v570 = vsel %vm569, %v561, %v566
      %v571 = vrsqrt.pop %v545
      %v572 = vmul.f32 %v571, %v545
      %v573 = vmul.f32 %v572, %v571
      %v574 = vmul.f32 0.5, %v573
      %v575 = vsub.f32 1.5, %v574
      %v576 = vmul.f32 %v571, %v575
      %vm577 = vweird.f32 %v545
      %vm578 = vweird.f32 %v571
      %vm579 = vmor %vm577, %vm578
      %v580 = vsel %vm579, %v571, %v576
      %v581 = vrsqrt.pop %v546
      %v582 = vmul.f32 %v581, %v546
      %v583 = vmul.f32 %v582, %v581
      %v584 = vmul.f32 0.5, %v583
      %v585 = vsub.f32 1.5, %v584
      %v586 = vmul.f32 %v581, %v585
      %vm587 = vweird.f32 %v546
      %vm588 = vweird.f32 %v581
      %vm589 = vmor %vm587, %vm588
      %v590 = vsel %vm589, %v581, %v586
      %v591 = vrsqrt.pop %v547
      %v592 = vmul.f32 %v591, %v547
      %v593 = vmul.f32 %v592, %v591
      %v594 = vmul.f32 0.5, %v593
      %v595 = vsub.f32 1.5, %v594
      %v596 = vmul.f32 %v591, %v595
      %vm597 = vweird.f32 %v547
      %vm598 = vweird.f32 %v591
      %vm599 = vmor %vm597, %vm598
      %v600 = vsel %vm599, %v591, %v596
      %v601 = vrsqrt.pop %v548
      %v602 = vmul.f32 %v601, %v548
      %v603 = vmul.f32 %v602, %v601
      %v604 = vmul.f32 0.5, %v603
      %v605 = vsub.f32 1.5, %v604
      %v606 = vmul.f32 %v601, %v605
      %vm607 = vweird.f32 %v548
      %vm608 = vweird.f32 %v601
      %vm609 = vmor %vm607, %vm608
      %v610 = vsel %vm609, %v601, %v606
      %v611 = vrsqrt.pop %v549
      %v612 = vmul.f32 %v611, %v549
      %v613 = vmul.f32 %v612, %v611
      %v614 = vmul.f32 0.5, %v613
      %v615 = vsub.f32 1.5, %v614
      %v616 = vmul.f32 %v611, %v615
      %vm617 = vweird.f32 %v549
      %vm618 = vweird.f32 %v611
      %vm619 = vmor %vm617, %vm618
      %v620 = vsel %vm619, %v611, %v616
      %v621 = vrsqrt.pop %v550
      %v622 = vmul.f32 %v621, %v550
      %v623 = vmul.f32 %v622, %v621
      %v624 = vmul.f32 0.5, %v623
      %v625 = vsub.f32 1.5, %v624
      %v626 = vmul.f32 %v621, %v625
      %vm627 = vweird.f32 %v550
      %vm628 = vweird.f32 %v621
      %vm629 = vmor %vm627, %vm628
      %v630 = vsel %vm629, %v621, %v626
      %v631 = vmul.f32 %v495, %v560
      %v632 = vmul.f32 %v496, %v570
      %v633 = vmul.f32 %v497, %v580
      %v634 = vmul.f32 %v498, %v590
      %v635 = vmul.f32 %v499, %v600
      %v636 = vmul.f32 %v500, %v610
      %v637 = vmul.f32 %v501, %v620
      %v638 = vmul.f32 %v502, %v630
      %v640 = vperm.slane %v453, 0
      %v642 = vmul.f32 %v631, %v640
      %v643 = vmul.f32 %v632, %v640
      %v644 = vmul.f32 %v633, %v640
      %v645 = vmul.f32 %v634, %v640
      %v646 = vmul.f32 %v635, %v640
      %v647 = vmul.f32 %v636, %v640
      %v648 = vmul.f32 %v637, %v640
      %v649 = vmul.f32 %v638, %v640
      %v651 = vperm.slane %v454, 0
      %v653 = vadd.f32 %v642, %v651
      %v654 = vadd.f32 %v643, %v651
      %v655 = vadd.f32 %v644, %v651
      %v656 = vadd.f32 %v645, %v651
      %v657 = vadd.f32 %v646, %v651
      %v658 = vadd.f32 %v647, %v651
      %v659 = vadd.f32 %v648, %v651
      %v660 = vadd.f32 %v649, %v651
      %v661 = vpack.c.bf16 %v654, %v653
      %v662 = vpack.c.bf16 %v656, %v655
      %v663 = vpack.c.bf16 %v658, %v657
      %v664 = vpack.c.bf16 %v660, %v659
      %v665 = vld [vmem:[%s3] sm:$0xf]
      %v666 = vld [vmem:[%s3 + $0x4] sm:$0xf]
      %v667 = vld [vmem:[%s3 + $0x8] sm:$0xf]
      %v668 = vld [vmem:[%s3 + $0xc] sm:$0xf]
      %v669 = vld [vmem:[%s4] sm:$0x1]
      %v671 = vperm.slane %v669, 0
      %v677 = vunpack.c.l.b16 %v665
      %v678 = vunpack.c.l.b16 %v666
      %v679 = vunpack.c.l.b16 %v667
      %v680 = vunpack.c.l.b16 %v668
      %v681 = vpack.c.b16 %v678, %v677
      %v682 = vpack.c.b16 %v680, %v679
      %v686 = vsel %vm455, %v661, 0
      %v689 = vsel %vm455, %v662, 0
      %v692 = vsel %vm455, %v663, 0
      %v695 = vsel %vm455, %v664, 0
      %697 = vmatpush.bf16.msra.mxu0 0
      %698 = vmatpush.bf16.msra.mxu0 0
      %699 = vmatpush.bf16.msra.mxu0 0
      %700 = vmatpush.bf16.msra.mxu0 0
      %701 = vmatpush.bf16.msra.mxu0 0
      %702 = vmatpush.bf16.msra.mxu0 0
      %703 = vmatpush.bf16.msra.mxu0 %v682
      %704 = vmatpush.bf16.msra.mxu0 %v681
      %705 = vmatmul.bf16.gmra.mxu0 %v686
      %v706 = vpop.f32.mrf.mxu0
      %v707 = vadd.f32 %v671, %v706
      %v708 = vpop.f32.mrf.mxu0
      %v709 = vadd.f32 %v671, %v708
      %710 = vmatmul.bf16.gmra.mxu0 %v689
      %v711 = vpop.f32.mrf.mxu0
      %v712 = vadd.f32 %v671, %v711
      %v713 = vpop.f32.mrf.mxu0
      %v714 = vadd.f32 %v671, %v713
      %715 = vmatmul.bf16.gmra.mxu0 %v692
      %v716 = vpop.f32.mrf.mxu0
      %v717 = vadd.f32 %v671, %v716
      %v718 = vpop.f32.mrf.mxu0
      %v719 = vadd.f32 %v671, %v718
      %720 = vmatmul.bf16.gmra.mxu0 %v695
      %v721 = vpop.f32.mrf.mxu0
      %v722 = vadd.f32 %v671, %v721
      %v723 = vpop.f32.mrf.mxu0
      %v724 = vadd.f32 %v671, %v723
      %725 = vdwg.mxu0
      %v726 = vpack.c.bf16 %v707, %v707
      %v727 = vpack.c.bf16 %v709, %v709
      %v728 = vpack.c.bf16 %v712, %v712
      %v729 = vpack.c.bf16 %v714, %v714
      %v730 = vpack.c.bf16 %v717, %v717
      %v731 = vpack.c.bf16 %v719, %v719
      %v732 = vpack.c.bf16 %v722, %v722
      %v733 = vpack.c.bf16 %v724, %v724
      %v742 = vunpack.c.l.b16 %v726
      %v743 = vunpack.c.l.b16 %v727
      %v744 = vunpack.c.l.b16 %v728
      %v745 = vunpack.c.l.b16 %v729
      %v746 = vunpack.c.l.b16 %v730
      %v747 = vunpack.c.l.b16 %v731
      %v748 = vunpack.c.l.b16 %v732
      %v749 = vunpack.c.l.b16 %v733
      %v750 = vpack.c.b16 %v743, %v742
      %v751 = vpack.c.b16 %v745, %v744
      %v752 = vpack.c.b16 %v747, %v746
      %v753 = vpack.c.b16 %v749, %v748
      %754 = vrot.lane.b32.xlu0 %v750, 96
      %v755 = vpop.permute.xlu0 %754
      %756 = vrot.lane.b32.xlu0 %v751, 96
      %v757 = vpop.permute.xlu0 %756
      %758 = vrot.lane.b32.xlu0 %v752, 96
      %v759 = vpop.permute.xlu0 %758
      %760 = vrot.lane.b32.xlu0 %v753, 96
      %v761 = vpop.permute.xlu0 %760
      %vm762 = vcmask 64512
      %v764 = vsel %vm762, %v750, 0
      %v767 = vsel %vm762, %v751, 0
      %v770 = vsel %vm762, %v752, 0
      %v773 = vsel %vm762, %v753, 0
      %v776 = vsel %vm762, %v755, 0
      %v779 = vsel %vm762, %v757, 0
      %v782 = vsel %vm762, %v759, 0
      %v785 = vsel %vm762, %v761, 0
      %787 = vmatpush.bf16.xpose.msra.mxu0 0
      %788 = vmatpush.bf16.xpose.msra.mxu0 0
      %789 = vmatpush.bf16.xpose.msra.mxu0 0
      %790 = vmatpush.bf16.xpose.msra.mxu0 0
      %791 = vmatpush.bf16.xpose.msra.mxu0 %v785
      %792 = vmatpush.bf16.xpose.msra.mxu0 %v782
      %793 = vmatpush.bf16.xpose.msra.mxu0 %v779
      %794 = vmatpush.bf16.xpose.msra.mxu0 %v776
      %795 = vmatmul.bf16.gmra.mxu0 %v764
      %v796 = vpop.f32.mrf.mxu0
      %v797 = vadd.f32 0.0, %v796
      %v798 = vpop.f32.mrf.mxu0
      %v799 = vadd.f32 0.0, %v798
      %800 = vmatmul.bf16.gmra.mxu0 %v767
      %v801 = vpop.f32.mrf.mxu0
      %v802 = vadd.f32 0.0, %v801
      %v803 = vpop.f32.mrf.mxu0
      %v804 = vadd.f32 0.0, %v803
      %805 = vmatmul.bf16.gmra.mxu0 %v770
      %v806 = vpop.f32.mrf.mxu0
      %v807 = vadd.f32 0.0, %v806
      %v808 = vpop.f32.mrf.mxu0
      %v809 = vadd.f32 0.0, %v808
      %810 = vmatmul.bf16.gmra.mxu0 %v773
      %v811 = vpop.f32.mrf.mxu0
      %v812 = vadd.f32 0.0, %v811
      %v813 = vpop.f32.mrf.mxu0
      %v814 = vadd.f32 0.0, %v813
      %815 = vdwg.mxu0
      %vm816 = vcmask 523264
      %v817 = vsel %vm816, %v797, -inf
      %818 = vmax.xlane.f32.xlu0 %v817
      %v819 = vpop.xlane.xlu0 %818
      %v820 = vsel %vm816, %v799, -inf
      %821 = vmax.xlane.f32.xlu0 %v820
      %v822 = vpop.xlane.xlu0 %821
      %v823 = vsel %vm816, %v802, -inf
      %824 = vmax.xlane.f32.xlu0 %v823
      %v825 = vpop.xlane.xlu0 %824
      %v826 = vsel %vm816, %v804, -inf
      %827 = vmax.xlane.f32.xlu0 %v826
      %v828 = vpop.xlane.xlu0 %827
      %v829 = vsel %vm816, %v807, -inf
      %830 = vmax.xlane.f32.xlu0 %v829
      %v831 = vpop.xlane.xlu0 %830
      %v832 = vsel %vm816, %v809, -inf
      %833 = vmax.xlane.f32.xlu0 %v832
      %v834 = vpop.xlane.xlu0 %833
      %v835 = vsel %vm816, %v812, -inf
      %836 = vmax.xlane.f32.xlu0 %v835
      %v837 = vpop.xlane.xlu0 %836
      %v838 = vsel %vm816, %v814, -inf
      %839 = vmax.xlane.f32.xlu0 %v838
      %v840 = vpop.xlane.xlu0 %839
      %v841 = vsub.f32 %v797, %v819
      %v842 = vsub.f32 %v799, %v822
      %v843 = vsub.f32 %v802, %v825
      %v844 = vsub.f32 %v804, %v828
      %v845 = vsub.f32 %v807, %v831
      %v846 = vsub.f32 %v809, %v834
      %v847 = vsub.f32 %v812, %v837
      %v848 = vsub.f32 %v814, %v840
      %v849 = vmul.f32 %v841, 1.442695
      %v850 = vpow.pop %v849
      %v851 = vmul.f32 %v842, 1.442695
      %v852 = vpow.pop %v851
      %v853 = vmul.f32 %v843, 1.442695
      %v854 = vpow.pop %v853
      %v855 = vmul.f32 %v844, 1.442695
      %v856 = vpow.pop %v855
      %v857 = vmul.f32 %v845, 1.442695
      %v858 = vpow.pop %v857
      %v859 = vmul.f32 %v846, 1.442695
      %v860 = vpow.pop %v859
      %v861 = vmul.f32 %v847, 1.442695
      %v862 = vpow.pop %v861
      %v863 = vmul.f32 %v848, 1.442695
      %v864 = vpow.pop %v863
      %v865 = vsel %vm816, %v850, 0.0
      %866 = vadd.xlane.f32.xlu0 %v865
      %v867 = vpop.xlane.xlu0 %866
      %v868 = vsel %vm816, %v852, 0.0
      %869 = vadd.xlane.f32.xlu0 %v868
      %v870 = vpop.xlane.xlu0 %869
      %v871 = vsel %vm816, %v854, 0.0
      %872 = vadd.xlane.f32.xlu0 %v871
      %v873 = vpop.xlane.xlu0 %872
      %v874 = vsel %vm816, %v856, 0.0
      %875 = vadd.xlane.f32.xlu0 %v874
      %v876 = vpop.xlane.xlu0 %875
      %v877 = vsel %vm816, %v858, 0.0
      %878 = vadd.xlane.f32.xlu0 %v877
      %v879 = vpop.xlane.xlu0 %878
      %v880 = vsel %vm816, %v860, 0.0
      %881 = vadd.xlane.f32.xlu0 %v880
      %v882 = vpop.xlane.xlu0 %881
      %v883 = vsel %vm816, %v862, 0.0
      %884 = vadd.xlane.f32.xlu0 %v883
      %v885 = vpop.xlane.xlu0 %884
      %v886 = vsel %vm816, %v864, 0.0
      %887 = vadd.xlane.f32.xlu0 %v886
      %v888 = vpop.xlane.xlu0 %887
      %v889 = vrcp.pop %v867
      %v890 = vrcp.pop %v870
      %v891 = vrcp.pop %v873
      %v892 = vrcp.pop %v876
      %v893 = vrcp.pop %v879
      %v894 = vrcp.pop %v882
      %v895 = vrcp.pop %v885
      %v896 = vrcp.pop %v888
      %v897 = vpack.c.bf16 %v852, %v850
      %v898 = vpack.c.bf16 %v856, %v854
      %v899 = vpack.c.bf16 %v860, %v858
      %v900 = vpack.c.bf16 %v864, %v862
      %901 = vrot.lane.b32.xlu0 %v750, 64
      %v902 = vpop.permute.xlu0 %901
      %903 = vrot.lane.b32.xlu0 %v751, 64
      %v904 = vpop.permute.xlu0 %903
      %905 = vrot.lane.b32.xlu0 %v752, 64
      %v906 = vpop.permute.xlu0 %905
      %907 = vrot.lane.b32.xlu0 %v753, 64
      %v908 = vpop.permute.xlu0 %907
      %v914 = vsel %vm816, %v897, 0
      %v917 = vsel %vm816, %v898, 0
      %v920 = vsel %vm816, %v899, 0
      %v923 = vsel %vm816, %v900, 0
      %925 = vmatpush.bf16.msra.mxu0 0
      %926 = vmatpush.bf16.msra.mxu0 0
      %927 = vmatpush.bf16.msra.mxu0 0
      %928 = vmatpush.bf16.msra.mxu0 0
      %929 = vmatpush.bf16.msra.mxu0 %v908
      %930 = vmatpush.bf16.msra.mxu0 %v906
      %931 = vmatpush.bf16.msra.mxu0 %v904
      %932 = vmatpush.bf16.msra.mxu0 %v902
      %933 = vmatmul.bf16.gmra.mxu0 %v914
      %v934 = vpop.f32.mrf.mxu0
      %v935 = vadd.f32 0.0, %v934
      %v936 = vpop.f32.mrf.mxu0
      %v937 = vadd.f32 0.0, %v936
      %938 = vmatmul.bf16.gmra.mxu0 %v917
      %v939 = vpop.f32.mrf.mxu0
      %v940 = vadd.f32 0.0, %v939
      %v941 = vpop.f32.mrf.mxu0
      %v942 = vadd.f32 0.0, %v941
      %943 = vmatmul.bf16.gmra.mxu0 %v920
      %v944 = vpop.f32.mrf.mxu0
      %v945 = vadd.f32 0.0, %v944
      %v946 = vpop.f32.mrf.mxu0
      %v947 = vadd.f32 0.0, %v946
      %948 = vmatmul.bf16.gmra.mxu0 %v923
      %v949 = vpop.f32.mrf.mxu0
      %v950 = vadd.f32 0.0, %v949
      %v951 = vpop.f32.mrf.mxu0
      %v952 = vadd.f32 0.0, %v951
      %953 = vdwg.mxu0
      %v954 = vmul.f32 %v935, %v889
      %v955 = vmul.f32 %v937, %v890
      %v956 = vmul.f32 %v940, %v891
      %v957 = vmul.f32 %v942, %v892
      %v958 = vmul.f32 %v945, %v893
      %v959 = vmul.f32 %v947, %v894
      %v960 = vmul.f32 %v950, %v895
      %v961 = vmul.f32 %v952, %v896
      %962 = vst.msk [vmem:[#allocation2] sm:$0xff] %vm762, %v954
      %963 = vst.msk [vmem:[#allocation2 + $0x8] sm:$0xff] %vm762, %v955
      %964 = vst.msk [vmem:[#allocation2 + $0x10] sm:$0xff] %vm762, %v956
      %965 = vst.msk [vmem:[#allocation2 + $0x18] sm:$0xff] %vm762, %v957
      %966 = vst.msk [vmem:[#allocation2 + $0x20] sm:$0xff] %vm762, %v958
      %967 = vst.msk [vmem:[#allocation2 + $0x28] sm:$0xff] %vm762, %v959
      %968 = vst.msk [vmem:[#allocation2 + $0x30] sm:$0xff] %vm762, %v960
      %969 = vst.msk [vmem:[#allocation2 + $0x38] sm:$0xff] %vm762, %v961
      %970 = vrot.lane.b32.xlu0 %v750, 120
      %v971 = vpop.permute.xlu0 %970
      %972 = vrot.lane.b32.xlu0 %v751, 120
      %v973 = vpop.permute.xlu0 %972
      %974 = vrot.lane.b32.xlu0 %v752, 120
      %v975 = vpop.permute.xlu0 %974
      %976 = vrot.lane.b32.xlu0 %v753, 120
      %v977 = vpop.permute.xlu0 %976
      %978 = vrot.lane.b32.xlu0 %v750, 88
      %v979 = vpop.permute.xlu0 %978
      %980 = vrot.lane.b32.xlu0 %v751, 88
      %v981 = vpop.permute.xlu0 %980
      %982 = vrot.lane.b32.xlu0 %v752, 88
      %v983 = vpop.permute.xlu0 %982
      %984 = vrot.lane.b32.xlu0 %v753, 88
      %v985 = vpop.permute.xlu0 %984
      %v987 = vsel %vm762, %v971, 0
      %v990 = vsel %vm762, %v973, 0
      %v993 = vsel %vm762, %v975, 0
      %v996 = vsel %vm762, %v977, 0
      %v999 = vsel %vm762, %v979, 0
      %v1002 = vsel %vm762, %v981, 0
      %v1005 = vsel %vm762, %v983, 0
      %v1008 = vsel %vm762, %v985, 0
      %1010 = vmatpush.bf16.xpose.msra.mxu0 0
      %1011 = vmatpush.bf16.xpose.msra.mxu0 0
      %1012 = vmatpush.bf16.xpose.msra.mxu0 0
      %1013 = vmatpush.bf16.xpose.msra.mxu0 0
      %1014 = vmatpush.bf16.xpose.msra.mxu0 %v1008
      %1015 = vmatpush.bf16.xpose.msra.mxu0 %v1005
      %1016 = vmatpush.bf16.xpose.msra.mxu0 %v1002
      %1017 = vmatpush.bf16.xpose.msra.mxu0 %v999
      %1018 = vmatmul.bf16.gmra.mxu0 %v987
      %v1019 = vpop.f32.mrf.mxu0
      %v1020 = vadd.f32 0.0, %v1019
      %v1021 = vpop.f32.mrf.mxu0
      %v1022 = vadd.f32 0.0, %v1021
      %1023 = vmatmul.bf16.gmra.mxu0 %v990
      %v1024 = vpop.f32.mrf.mxu0
      %v1025 = vadd.f32 0.0, %v1024
      %v1026 = vpop.f32.mrf.mxu0
      %v1027 = vadd.f32 0.0, %v1026
      %1028 = vmatmul.bf16.gmra.mxu0 %v993
      %v1029 = vpop.f32.mrf.mxu0
      %v1030 = vadd.f32 0.0, %v1029
      %v1031 = vpop.f32.mrf.mxu0
      %v1032 = vadd.f32 0.0, %v1031
      %1033 = vmatmul.bf16.gmra.mxu0 %v996
      %v1034 = vpop.f32.mrf.mxu0
      %v1035 = vadd.f32 0.0, %v1034
      %v1036 = vpop.f32.mrf.mxu0
      %v1037 = vadd.f32 0.0, %v1036
      %1038 = vdwg.mxu0
      %v1039 = vsel %vm816, %v1020, -inf
      %1040 = vmax.xlane.f32.xlu0 %v1039
      %v1041 = vpop.xlane.xlu0 %1040
      %v1042 = vsel %vm816, %v1022, -inf
      %1043 = vmax.xlane.f32.xlu0 %v1042
      %v1044 = vpop.xlane.xlu0 %1043
      %v1045 = vsel %vm816, %v1025, -inf
      %1046 = vmax.xlane.f32.xlu0 %v1045
      %v1047 = vpop.xlane.xlu0 %1046
      %v1048 = vsel %vm816, %v1027, -inf
      %1049 = vmax.xlane.f32.xlu0 %v1048
      %v1050 = vpop.xlane.xlu0 %1049
      %v1051 = vsel %vm816, %v1030, -inf
      %1052 = vmax.xlane.f32.xlu0 %v1051
      %v1053 = vpop.xlane.xlu0 %1052
      %v1054 = vsel %vm816, %v1032, -inf
      %1055 = vmax.xlane.f32.xlu0 %v1054
      %v1056 = vpop.xlane.xlu0 %1055
      %v1057 = vsel %vm816, %v1035, -inf
      %1058 = vmax.xlane.f32.xlu0 %v1057
      %v1059 = vpop.xlane.xlu0 %1058
      %v1060 = vsel %vm816, %v1037, -inf
      %1061 = vmax.xlane.f32.xlu0 %v1060
      %v1062 = vpop.xlane.xlu0 %1061
      %v1063 = vsub.f32 %v1020, %v1041
      %v1064 = vsub.f32 %v1022, %v1044
      %v1065 = vsub.f32 %v1025, %v1047
      %v1066 = vsub.f32 %v1027, %v1050
      %v1067 = vsub.f32 %v1030, %v1053
      %v1068 = vsub.f32 %v1032, %v1056
      %v1069 = vsub.f32 %v1035, %v1059
      %v1070 = vsub.f32 %v1037, %v1062
      %v1071 = vmul.f32 %v1063, 1.442695
      %v1072 = vpow.pop %v1071
      %v1073 = vmul.f32 %v1064, 1.442695
      %v1074 = vpow.pop %v1073
      %v1075 = vmul.f32 %v1065, 1.442695
      %v1076 = vpow.pop %v1075
      %v1077 = vmul.f32 %v1066, 1.442695
      %v1078 = vpow.pop %v1077
      %v1079 = vmul.f32 %v1067, 1.442695
      %v1080 = vpow.pop %v1079
      %v1081 = vmul.f32 %v1068, 1.442695
      %v1082 = vpow.pop %v1081
      %v1083 = vmul.f32 %v1069, 1.442695
      %v1084 = vpow.pop %v1083
      %v1085 = vmul.f32 %v1070, 1.442695
      %v1086 = vpow.pop %v1085
      %v1087 = vsel %vm816, %v1072, 0.0
      %1088 = vadd.xlane.f32.xlu0 %v1087
      %v1089 = vpop.xlane.xlu0 %1088
      %v1090 = vsel %vm816, %v1074, 0.0
      %1091 = vadd.xlane.f32.xlu0 %v1090
      %v1092 = vpop.xlane.xlu0 %1091
      %v1093 = vsel %vm816, %v1076, 0.0
      %1094 = vadd.xlane.f32.xlu0 %v1093
      %v1095 = vpop.xlane.xlu0 %1094
      %v1096 = vsel %vm816, %v1078, 0.0
      %1097 = vadd.xlane.f32.xlu0 %v1096
      %v1098 = vpop.xlane.xlu0 %1097
      %v1099 = vsel %vm816, %v1080, 0.0
      %1100 = vadd.xlane.f32.xlu0 %v1099
      %v1101 = vpop.xlane.xlu0 %1100
      %v1102 = vsel %vm816, %v1082, 0.0
      %1103 = vadd.xlane.f32.xlu0 %v1102
      %v1104 = vpop.xlane.xlu0 %1103
      %v1105 = vsel %vm816, %v1084, 0.0
      %1106 = vadd.xlane.f32.xlu0 %v1105
      %v1107 = vpop.xlane.xlu0 %1106
      %v1108 = vsel %vm816, %v1086, 0.0
      %1109 = vadd.xlane.f32.xlu0 %v1108
      %v1110 = vpop.xlane.xlu0 %1109
      %v1111 = vrcp.pop %v1089
      %v1112 = vrcp.pop %v1092
      %v1113 = vrcp.pop %v1095
      %v1114 = vrcp.pop %v1098
      %v1115 = vrcp.pop %v1101
      %v1116 = vrcp.pop %v1104
      %v1117 = vrcp.pop %v1107
      %v1118 = vrcp.pop %v1110
      %v1119 = vpack.c.bf16 %v1074, %v1072
      %v1120 = vpack.c.bf16 %v1078, %v1076
      %v1121 = vpack.c.bf16 %v1082, %v1080
      %v1122 = vpack.c.bf16 %v1086, %v1084
      %1123 = vrot.lane.b32.xlu0 %v750, 56
      %v1124 = vpop.permute.xlu0 %1123
      %1125 = vrot.lane.b32.xlu0 %v751, 56
      %v1126 = vpop.permute.xlu0 %1125
      %1127 = vrot.lane.b32.xlu0 %v752, 56
      %v1128 = vpop.permute.xlu0 %1127
      %1129 = vrot.lane.b32.xlu0 %v753, 56
      %v1130 = vpop.permute.xlu0 %1129
      %v1136 = vsel %vm816, %v1119, 0
      %v1139 = vsel %vm816, %v1120, 0
      %v1142 = vsel %vm816, %v1121, 0
      %v1145 = vsel %vm816, %v1122, 0
      %1147 = vmatpush.bf16.msra.mxu0 0
      %1148 = vmatpush.bf16.msra.mxu0 0
      %1149 = vmatpush.bf16.msra.mxu0 0
      %1150 = vmatpush.bf16.msra.mxu0 0
      %1151 = vmatpush.bf16.msra.mxu0 %v1130
      %1152 = vmatpush.bf16.msra.mxu0 %v1128
      %1153 = vmatpush.bf16.msra.mxu0 %v1126
      %1154 = vmatpush.bf16.msra.mxu0 %v1124
      %1155 = vmatmul.bf16.gmra.mxu0 %v1136
      %v1156 = vpop.f32.mrf.mxu0
      %v1157 = vadd.f32 0.0, %v1156
      %v1158 = vpop.f32.mrf.mxu0
      %v1159 = vadd.f32 0.0, %v1158
      %1160 = vmatmul.bf16.gmra.mxu0 %v1139
      %v1161 = vpop.f32.mrf.mxu0
      %v1162 = vadd.f32 0.0, %v1161
      %v1163 = vpop.f32.mrf.mxu0
      %v1164 = vadd.f32 0.0, %v1163
      %1165 = vmatmul.bf16.gmra.mxu0 %v1142
      %v1166 = vpop.f32.mrf.mxu0
      %v1167 = vadd.f32 0.0, %v1166
      %v1168 = vpop.f32.mrf.mxu0
      %v1169 = vadd.f32 0.0, %v1168
      %1170 = vmatmul.bf16.gmra.mxu0 %v1145
      %v1171 = vpop.f32.mrf.mxu0
      %v1172 = vadd.f32 0.0, %v1171
      %v1173 = vpop.f32.mrf.mxu0
      %v1174 = vadd.f32 0.0, %v1173
      %1175 = vdwg.mxu0
      %v1176 = vmul.f32 %v1157, %v1111
      %v1177 = vmul.f32 %v1159, %v1112
      %v1178 = vmul.f32 %v1162, %v1113
      %v1179 = vmul.f32 %v1164, %v1114
      %v1180 = vmul.f32 %v1167, %v1115
      %v1181 = vmul.f32 %v1169, %v1116
      %v1182 = vmul.f32 %v1172, %v1117
      %v1183 = vmul.f32 %v1174, %v1118
      %1192 = vrot.lane.b32.xlu0 %v1176, 8
      %v1193 = vpop.permute.xlu0 %1192
      %1194 = vrot.lane.b32.xlu0 %v1177, 8
      %v1195 = vpop.permute.xlu0 %1194
      %1196 = vrot.lane.b32.xlu0 %v1178, 8
      %v1197 = vpop.permute.xlu0 %1196
      %1198 = vrot.lane.b32.xlu0 %v1179, 8
      %v1199 = vpop.permute.xlu0 %1198
      %1200 = vrot.lane.b32.xlu0 %v1180, 8
      %v1201 = vpop.permute.xlu0 %1200
      %1202 = vrot.lane.b32.xlu0 %v1181, 8
      %v1203 = vpop.permute.xlu0 %1202
      %1204 = vrot.lane.b32.xlu0 %v1182, 8
      %v1205 = vpop.permute.xlu0 %1204
      %1206 = vrot.lane.b32.xlu0 %v1183, 8
      %v1207 = vpop.permute.xlu0 %1206
      %vm1216 = vcmask 130112
      %1217 = vst.msk [vmem:[#allocation2] sm:$0xff] %vm1216, %v1193
      %1218 = vst.msk [vmem:[#allocation2 + $0x8] sm:$0xff] %vm1216, %v1195
      %1219 = vst.msk [vmem:[#allocation2 + $0x10] sm:$0xff] %vm1216, %v1197
      %1220 = vst.msk [vmem:[#allocation2 + $0x18] sm:$0xff] %vm1216, %v1199
      %1221 = vst.msk [vmem:[#allocation2 + $0x20] sm:$0xff] %vm1216, %v1201
      %1222 = vst.msk [vmem:[#allocation2 + $0x28] sm:$0xff] %vm1216, %v1203
      %1223 = vst.msk [vmem:[#allocation2 + $0x30] sm:$0xff] %vm1216, %v1205
      %1224 = vst.msk [vmem:[#allocation2 + $0x38] sm:$0xff] %vm1216, %v1207
      %1225 = vrot.lane.b32.xlu0 %v750, 112
      %v1226 = vpop.permute.xlu0 %1225
      %1227 = vrot.lane.b32.xlu0 %v751, 112
      %v1228 = vpop.permute.xlu0 %1227
      %1229 = vrot.lane.b32.xlu0 %v752, 112
      %v1230 = vpop.permute.xlu0 %1229
      %1231 = vrot.lane.b32.xlu0 %v753, 112
      %v1232 = vpop.permute.xlu0 %1231
      %1233 = vrot.lane.b32.xlu0 %v750, 80
      %v1234 = vpop.permute.xlu0 %1233
      %1235 = vrot.lane.b32.xlu0 %v751, 80
      %v1236 = vpop.permute.xlu0 %1235
      %1237 = vrot.lane.b32.xlu0 %v752, 80
      %v1238 = vpop.permute.xlu0 %1237
      %1239 = vrot.lane.b32.xlu0 %v753, 80
      %v1240 = vpop.permute.xlu0 %1239
      %v1242 = vsel %vm762, %v1226, 0
      %v1245 = vsel %vm762, %v1228, 0
      %v1248 = vsel %vm762, %v1230, 0
      %v1251 = vsel %vm762, %v1232, 0
      %v1254 = vsel %vm762, %v1234, 0
      %v1257 = vsel %vm762, %v1236, 0
      %v1260 = vsel %vm762, %v1238, 0
      %v1263 = vsel %vm762, %v1240, 0
      %1265 = vmatpush.bf16.xpose.msra.mxu0 0
      %1266 = vmatpush.bf16.xpose.msra.mxu0 0
      %1267 = vmatpush.bf16.xpose.msra.mxu0 0
      %1268 = vmatpush.bf16.xpose.msra.mxu0 0
      %1269 = vmatpush.bf16.xpose.msra.mxu0 %v1263
      %1270 = vmatpush.bf16.xpose.msra.mxu0 %v1260
      %1271 = vmatpush.bf16.xpose.msra.mxu0 %v1257
      %1272 = vmatpush.bf16.xpose.msra.mxu0 %v1254
      %1273 = vmatmul.bf16.gmra.mxu0 %v1242
      %v1274 = vpop.f32.mrf.mxu0
      %v1275 = vadd.f32 0.0, %v1274
      %v1276 = vpop.f32.mrf.mxu0
      %v1277 = vadd.f32 0.0, %v1276
      %1278 = vmatmul.bf16.gmra.mxu0 %v1245
      %v1279 = vpop.f32.mrf.mxu0
      %v1280 = vadd.f32 0.0, %v1279
      %v1281 = vpop.f32.mrf.mxu0
      %v1282 = vadd.f32 0.0, %v1281
      %1283 = vmatmul.bf16.gmra.mxu0 %v1248
      %v1284 = vpop.f32.mrf.mxu0
      %v1285 = vadd.f32 0.0, %v1284
      %v1286 = vpop.f32.mrf.mxu0
      %v1287 = vadd.f32 0.0, %v1286
      %1288 = vmatmul.bf16.gmra.mxu0 %v1251
      %v1289 = vpop.f32.mrf.mxu0
      %v1290 = vadd.f32 0.0, %v1289
      %v1291 = vpop.f32.mrf.mxu0
      %v1292 = vadd.f32 0.0, %v1291
      %1293 = vdwg.mxu0
      %v1294 = vsel %vm816, %v1275, -inf
      %1295 = vmax.xlane.f32.xlu0 %v1294
      %v1296 = vpop.xlane.xlu0 %1295
      %v1297 = vsel %vm816, %v1277, -inf
      %1298 = vmax.xlane.f32.xlu0 %v1297
      %v1299 = vpop.xlane.xlu0 %1298
      %v1300 = vsel %vm816, %v1280, -inf
      %1301 = vmax.xlane.f32.xlu0 %v1300
      %v1302 = vpop.xlane.xlu0 %1301
      %v1303 = vsel %vm816, %v1282, -inf
      %1304 = vmax.xlane.f32.xlu0 %v1303
      %v1305 = vpop.xlane.xlu0 %1304
      %v1306 = vsel %vm816, %v1285, -inf
      %1307 = vmax.xlane.f32.xlu0 %v1306
      %v1308 = vpop.xlane.xlu0 %1307
      %v1309 = vsel %vm816, %v1287, -inf
      %1310 = vmax.xlane.f32.xlu0 %v1309
      %v1311 = vpop.xlane.xlu0 %1310
      %v1312 = vsel %vm816, %v1290, -inf
      %1313 = vmax.xlane.f32.xlu0 %v1312
      %v1314 = vpop.xlane.xlu0 %1313
      %v1315 = vsel %vm816, %v1292, -inf
      %1316 = vmax.xlane.f32.xlu0 %v1315
      %v1317 = vpop.xlane.xlu0 %1316
      %v1318 = vsub.f32 %v1275, %v1296
      %v1319 = vsub.f32 %v1277, %v1299
      %v1320 = vsub.f32 %v1280, %v1302
      %v1321 = vsub.f32 %v1282, %v1305
      %v1322 = vsub.f32 %v1285, %v1308
      %v1323 = vsub.f32 %v1287, %v1311
      %v1324 = vsub.f32 %v1290, %v1314
      %v1325 = vsub.f32 %v1292, %v1317
      %v1326 = vmul.f32 %v1318, 1.442695
      %v1327 = vpow.pop %v1326
      %v1328 = vmul.f32 %v1319, 1.442695
      %v1329 = vpow.pop %v1328
      %v1330 = vmul.f32 %v1320, 1.442695
      %v1331 = vpow.pop %v1330
      %v1332 = vmul.f32 %v1321, 1.442695
      %v1333 = vpow.pop %v1332
      %v1334 = vmul.f32 %v1322, 1.442695
      %v1335 = vpow.pop %v1334
      %v1336 = vmul.f32 %v1323, 1.442695
      %v1337 = vpow.pop %v1336
      %v1338 = vmul.f32 %v1324, 1.442695
      %v1339 = vpow.pop %v1338
      %v1340 = vmul.f32 %v1325, 1.442695
      %v1341 = vpow.pop %v1340
      %v1342 = vsel %vm816, %v1327, 0.0
      %1343 = vadd.xlane.f32.xlu0 %v1342
      %v1344 = vpop.xlane.xlu0 %1343
      %v1345 = vsel %vm816, %v1329, 0.0
      %1346 = vadd.xlane.f32.xlu0 %v1345
      %v1347 = vpop.xlane.xlu0 %1346
      %v1348 = vsel %vm816, %v1331, 0.0
      %1349 = vadd.xlane.f32.xlu0 %v1348
      %v1350 = vpop.xlane.xlu0 %1349
      %v1351 = vsel %vm816, %v1333, 0.0
      %1352 = vadd.xlane.f32.xlu0 %v1351
      %v1353 = vpop.xlane.xlu0 %1352
      %v1354 = vsel %vm816, %v1335, 0.0
      %1355 = vadd.xlane.f32.xlu0 %v1354
      %v1356 = vpop.xlane.xlu0 %1355
      %v1357 = vsel %vm816, %v1337, 0.0
      %1358 = vadd.xlane.f32.xlu0 %v1357
      %v1359 = vpop.xlane.xlu0 %1358
      %v1360 = vsel %vm816, %v1339, 0.0
      %1361 = vadd.xlane.f32.xlu0 %v1360
      %v1362 = vpop.xlane.xlu0 %1361
      %v1363 = vsel %vm816, %v1341, 0.0
      %1364 = vadd.xlane.f32.xlu0 %v1363
      %v1365 = vpop.xlane.xlu0 %1364
      %v1366 = vrcp.pop %v1344
      %v1367 = vrcp.pop %v1347
      %v1368 = vrcp.pop %v1350
      %v1369 = vrcp.pop %v1353
      %v1370 = vrcp.pop %v1356
      %v1371 = vrcp.pop %v1359
      %v1372 = vrcp.pop %v1362
      %v1373 = vrcp.pop %v1365
      %v1374 = vpack.c.bf16 %v1329, %v1327
      %v1375 = vpack.c.bf16 %v1333, %v1331
      %v1376 = vpack.c.bf16 %v1337, %v1335
      %v1377 = vpack.c.bf16 %v1341, %v1339
      %1378 = vrot.lane.b32.xlu0 %v750, 48
      %v1379 = vpop.permute.xlu0 %1378
      %1380 = vrot.lane.b32.xlu0 %v751, 48
      %v1381 = vpop.permute.xlu0 %1380
      %1382 = vrot.lane.b32.xlu0 %v752, 48
      %v1383 = vpop.permute.xlu0 %1382
      %1384 = vrot.lane.b32.xlu0 %v753, 48
      %v1385 = vpop.permute.xlu0 %1384
      %v1391 = vsel %vm816, %v1374, 0
      %v1394 = vsel %vm816, %v1375, 0
      %v1397 = vsel %vm816, %v1376, 0
      %v1400 = vsel %vm816, %v1377, 0
      %1402 = vmatpush.bf16.msra.mxu0 0
      %1403 = vmatpush.bf16.msra.mxu0 0
      %1404 = vmatpush.bf16.msra.mxu0 0
      %1405 = vmatpush.bf16.msra.mxu0 0
      %1406 = vmatpush.bf16.msra.mxu0 %v1385
      %1407 = vmatpush.bf16.msra.mxu0 %v1383
      %1408 = vmatpush.bf16.msra.mxu0 %v1381
      %1409 = vmatpush.bf16.msra.mxu0 %v1379
      %1410 = vmatmul.bf16.gmra.mxu0 %v1391
      %v1411 = vpop.f32.mrf.mxu0
      %v1412 = vadd.f32 0.0, %v1411
      %v1413 = vpop.f32.mrf.mxu0
      %v1414 = vadd.f32 0.0, %v1413
      %1415 = vmatmul.bf16.gmra.mxu0 %v1394
      %v1416 = vpop.f32.mrf.mxu0
      %v1417 = vadd.f32 0.0, %v1416
      %v1418 = vpop.f32.mrf.mxu0
      %v1419 = vadd.f32 0.0, %v1418
      %1420 = vmatmul.bf16.gmra.mxu0 %v1397
      %v1421 = vpop.f32.mrf.mxu0
      %v1422 = vadd.f32 0.0, %v1421
      %v1423 = vpop.f32.mrf.mxu0
      %v1424 = vadd.f32 0.0, %v1423
      %1425 = vmatmul.bf16.gmra.mxu0 %v1400
      %v1426 = vpop.f32.mrf.mxu0
      %v1427 = vadd.f32 0.0, %v1426
      %v1428 = vpop.f32.mrf.mxu0
      %v1429 = vadd.f32 0.0, %v1428
      %1430 = vdwg.mxu0
      %v1431 = vmul.f32 %v1412, %v1366
      %v1432 = vmul.f32 %v1414, %v1367
      %v1433 = vmul.f32 %v1417, %v1368
      %v1434 = vmul.f32 %v1419, %v1369
      %v1435 = vmul.f32 %v1422, %v1370
      %v1436 = vmul.f32 %v1424, %v1371
      %v1437 = vmul.f32 %v1427, %v1372
      %v1438 = vmul.f32 %v1429, %v1373
      %1447 = vrot.lane.b32.xlu0 %v1431, 16
      %v1448 = vpop.permute.xlu0 %1447
      %1449 = vrot.lane.b32.xlu0 %v1432, 16
      %v1450 = vpop.permute.xlu0 %1449
      %1451 = vrot.lane.b32.xlu0 %v1433, 16
      %v1452 = vpop.permute.xlu0 %1451
      %1453 = vrot.lane.b32.xlu0 %v1434, 16
      %v1454 = vpop.permute.xlu0 %1453
      %1455 = vrot.lane.b32.xlu0 %v1435, 16
      %v1456 = vpop.permute.xlu0 %1455
      %1457 = vrot.lane.b32.xlu0 %v1436, 16
      %v1458 = vpop.permute.xlu0 %1457
      %1459 = vrot.lane.b32.xlu0 %v1437, 16
      %v1460 = vpop.permute.xlu0 %1459
      %1461 = vrot.lane.b32.xlu0 %v1438, 16
      %v1462 = vpop.permute.xlu0 %1461
      %vm1471 = vcmask 195712
      %1472 = vst.msk [vmem:[#allocation2] sm:$0xff] %vm1471, %v1448
      %1473 = vst.msk [vmem:[#allocation2 + $0x8] sm:$0xff] %vm1471, %v1450
      %1474 = vst.msk [vmem:[#allocation2 + $0x10] sm:$0xff] %vm1471, %v1452
      %1475 = vst.msk [vmem:[#allocation2 + $0x18] sm:$0xff] %vm1471, %v1454
      %1476 = vst.msk [vmem:[#allocation2 + $0x20] sm:$0xff] %vm1471, %v1456
      %1477 = vst.msk [vmem:[#allocation2 + $0x28] sm:$0xff] %vm1471, %v1458
      %1478 = vst.msk [vmem:[#allocation2 + $0x30] sm:$0xff] %vm1471, %v1460
      %1479 = vst.msk [vmem:[#allocation2 + $0x38] sm:$0xff] %vm1471, %v1462
      %1480 = vrot.lane.b32.xlu0 %v750, 104
      %v1481 = vpop.permute.xlu0 %1480
      %1482 = vrot.lane.b32.xlu0 %v751, 104
      %v1483 = vpop.permute.xlu0 %1482
      %1484 = vrot.lane.b32.xlu0 %v752, 104
      %v1485 = vpop.permute.xlu0 %1484
      %1486 = vrot.lane.b32.xlu0 %v753, 104
      %v1487 = vpop.permute.xlu0 %1486
      %1488 = vrot.lane.b32.xlu0 %v750, 72
      %v1489 = vpop.permute.xlu0 %1488
      %1490 = vrot.lane.b32.xlu0 %v751, 72
      %v1491 = vpop.permute.xlu0 %1490
      %1492 = vrot.lane.b32.xlu0 %v752, 72
      %v1493 = vpop.permute.xlu0 %1492
      %1494 = vrot.lane.b32.xlu0 %v753, 72
      %v1495 = vpop.permute.xlu0 %1494
      %v1497 = vsel %vm762, %v1481, 0
      %v1500 = vsel %vm762, %v1483, 0
      %v1503 = vsel %vm762, %v1485, 0
      %v1506 = vsel %vm762, %v1487, 0
      %v1509 = vsel %vm762, %v1489, 0
      %v1512 = vsel %vm762, %v1491, 0
      %v1515 = vsel %vm762, %v1493, 0
      %v1518 = vsel %vm762, %v1495, 0
      %1520 = vmatpush.bf16.xpose.msra.mxu0 0
      %1521 = vmatpush.bf16.xpose.msra.mxu0 0
      %1522 = vmatpush.bf16.xpose.msra.mxu0 0
      %1523 = vmatpush.bf16.xpose.msra.mxu0 0
      %1524 = vmatpush.bf16.xpose.msra.mxu0 %v1518
      %1525 = vmatpush.bf16.xpose.msra.mxu0 %v1515
      %1526 = vmatpush.bf16.xpose.msra.mxu0 %v1512
      %1527 = vmatpush.bf16.xpose.msra.mxu0 %v1509
      %1528 = vmatmul.bf16.gmra.mxu0 %v1497
      %v1529 = vpop.f32.mrf.mxu0
      %v1530 = vadd.f32 0.0, %v1529
      %v1531 = vpop.f32.mrf.mxu0
      %v1532 = vadd.f32 0.0, %v1531
      %1533 = vmatmul.bf16.gmra.mxu0 %v1500
      %v1534 = vpop.f32.mrf.mxu0
      %v1535 = vadd.f32 0.0, %v1534
      %v1536 = vpop.f32.mrf.mxu0
      %v1537 = vadd.f32 0.0, %v1536
      %1538 = vmatmul.bf16.gmra.mxu0 %v1503
      %v1539 = vpop.f32.mrf.mxu0
      %v1540 = vadd.f32 0.0, %v1539
      %v1541 = vpop.f32.mrf.mxu0
      %v1542 = vadd.f32 0.0, %v1541
      %1543 = vmatmul.bf16.gmra.mxu0 %v1506
      %v1544 = vpop.f32.mrf.mxu0
      %v1545 = vadd.f32 0.0, %v1544
      %v1546 = vpop.f32.mrf.mxu0
      %v1547 = vadd.f32 0.0, %v1546
      %1548 = vdwg.mxu0
      %v1549 = vsel %vm816, %v1530, -inf
      %1550 = vmax.xlane.f32.xlu0 %v1549
      %v1551 = vpop.xlane.xlu0 %1550
      %v1552 = vsel %vm816, %v1532, -inf
      %1553 = vmax.xlane.f32.xlu0 %v1552
      %v1554 = vpop.xlane.xlu0 %1553
      %v1555 = vsel %vm816, %v1535, -inf
      %1556 = vmax.xlane.f32.xlu0 %v1555
      %v1557 = vpop.xlane.xlu0 %1556
      %v1558 = vsel %vm816, %v1537, -inf
      %1559 = vmax.xlane.f32.xlu0 %v1558
      %v1560 = vpop.xlane.xlu0 %1559
      %v1561 = vsel %vm816, %v1540, -inf
      %1562 = vmax.xlane.f32.xlu0 %v1561
      %v1563 = vpop.xlane.xlu0 %1562
      %v1564 = vsel %vm816, %v1542, -inf
      %1565 = vmax.xlane.f32.xlu0 %v1564
      %v1566 = vpop.xlane.xlu0 %1565
      %v1567 = vsel %vm816, %v1545, -inf
      %1568 = vmax.xlane.f32.xlu0 %v1567
      %v1569 = vpop.xlane.xlu0 %1568
      %v1570 = vsel %vm816, %v1547, -inf
      %1571 = vmax.xlane.f32.xlu0 %v1570
      %v1572 = vpop.xlane.xlu0 %1571
      %v1573 = vsub.f32 %v1530, %v1551
      %v1574 = vsub.f32 %v1532, %v1554
      %v1575 = vsub.f32 %v1535, %v1557
      %v1576 = vsub.f32 %v1537, %v1560
      %v1577 = vsub.f32 %v1540, %v1563
      %v1578 = vsub.f32 %v1542, %v1566
      %v1579 = vsub.f32 %v1545, %v1569
      %v1580 = vsub.f32 %v1547, %v1572
      %v1581 = vmul.f32 %v1573, 1.442695
      %v1582 = vpow.pop %v1581
      %v1583 = vmul.f32 %v1574, 1.442695
      %v1584 = vpow.pop %v1583
      %v1585 = vmul.f32 %v1575, 1.442695
      %v1586 = vpow.pop %v1585
      %v1587 = vmul.f32 %v1576, 1.442695
      %v1588 = vpow.pop %v1587
      %v1589 = vmul.f32 %v1577, 1.442695
      %v1590 = vpow.pop %v1589
      %v1591 = vmul.f32 %v1578, 1.442695
      %v1592 = vpow.pop %v1591
      %v1593 = vmul.f32 %v1579, 1.442695
      %v1594 = vpow.pop %v1593
      %v1595 = vmul.f32 %v1580, 1.442695
      %v1596 = vpow.pop %v1595
      %v1597 = vsel %vm816, %v1582, 0.0
      %1598 = vadd.xlane.f32.xlu0 %v1597
      %v1599 = vpop.xlane.xlu0 %1598
      %v1600 = vsel %vm816, %v1584, 0.0
      %1601 = vadd.xlane.f32.xlu0 %v1600
      %v1602 = vpop.xlane.xlu0 %1601
      %v1603 = vsel %vm816, %v1586, 0.0
      %1604 = vadd.xlane.f32.xlu0 %v1603
      %v1605 = vpop.xlane.xlu0 %1604
      %v1606 = vsel %vm816, %v1588, 0.0
      %1607 = vadd.xlane.f32.xlu0 %v1606
      %v1608 = vpop.xlane.xlu0 %1607
      %v1609 = vsel %vm816, %v1590, 0.0
      %1610 = vadd.xlane.f32.xlu0 %v1609
      %v1611 = vpop.xlane.xlu0 %1610
      %v1612 = vsel %vm816, %v1592, 0.0
      %1613 = vadd.xlane.f32.xlu0 %v1612
      %v1614 = vpop.xlane.xlu0 %1613
      %v1615 = vsel %vm816, %v1594, 0.0
      %1616 = vadd.xlane.f32.xlu0 %v1615
      %v1617 = vpop.xlane.xlu0 %1616
      %v1618 = vsel %vm816, %v1596, 0.0
      %1619 = vadd.xlane.f32.xlu0 %v1618
      %v1620 = vpop.xlane.xlu0 %1619
      %v1621 = vrcp.pop %v1599
      %v1622 = vrcp.pop %v1602
      %v1623 = vrcp.pop %v1605
      %v1624 = vrcp.pop %v1608
      %v1625 = vrcp.pop %v1611
      %v1626 = vrcp.pop %v1614
      %v1627 = vrcp.pop %v1617
      %v1628 = vrcp.pop %v1620
      %v1629 = vpack.c.bf16 %v1584, %v1582
      %v1630 = vpack.c.bf16 %v1588, %v1586
      %v1631 = vpack.c.bf16 %v1592, %v1590
      %v1632 = vpack.c.bf16 %v1596, %v1594
      %1633 = vrot.lane.b32.xlu0 %v750, 40
      %v1634 = vpop.permute.xlu0 %1633
      %1635 = vrot.lane.b32.xlu0 %v751, 40
      %v1636 = vpop.permute.xlu0 %1635
      %1637 = vrot.lane.b32.xlu0 %v752, 40
      %v1638 = vpop.permute.xlu0 %1637
      %1639 = vrot.lane.b32.xlu0 %v753, 40
      %v1640 = vpop.permute.xlu0 %1639
      %v1646 = vsel %vm816, %v1629, 0
      %v1649 = vsel %vm816, %v1630, 0
      %v1652 = vsel %vm816, %v1631, 0
      %v1655 = vsel %vm816, %v1632, 0
      %1657 = vmatpush.bf16.msra.mxu0 0
      %1658 = vmatpush.bf16.msra.mxu0 0
      %1659 = vmatpush.bf16.msra.mxu0 0
      %1660 = vmatpush.bf16.msra.mxu0 0
      %1661 = vmatpush.bf16.msra.mxu0 %v1640
      %1662 = vmatpush.bf16.msra.mxu0 %v1638
      %1663 = vmatpush.bf16.msra.mxu0 %v1636
      %1664 = vmatpush.bf16.msra.mxu0 %v1634
      %1665 = vmatmul.bf16.gmra.mxu0 %v1646
      %v1666 = vpop.f32.mrf.mxu0
      %v1667 = vadd.f32 0.0, %v1666
      %v1668 = vpop.f32.mrf.mxu0
      %v1669 = vadd.f32 0.0, %v1668
      %1670 = vmatmul.bf16.gmra.mxu0 %v1649
      %v1671 = vpop.f32.mrf.mxu0
      %v1672 = vadd.f32 0.0, %v1671
      %v1673 = vpop.f32.mrf.mxu0
      %v1674 = vadd.f32 0.0, %v1673
      %1675 = vmatmul.bf16.gmra.mxu0 %v1652
      %v1676 = vpop.f32.mrf.mxu0
      %v1677 = vadd.f32 0.0, %v1676
      %v1678 = vpop.f32.mrf.mxu0
      %v1679 = vadd.f32 0.0, %v1678
      %1680 = vmatmul.bf16.gmra.mxu0 %v1655
      %v1681 = vpop.f32.mrf.mxu0
      %v1682 = vadd.f32 0.0, %v1681
      %v1683 = vpop.f32.mrf.mxu0
      %v1684 = vadd.f32 0.0, %v1683
      %1685 = vdwg.mxu0
      %v1686 = vmul.f32 %v1667, %v1621
      %v1687 = vmul.f32 %v1669, %v1622
      %v1688 = vmul.f32 %v1672, %v1623
      %v1689 = vmul.f32 %v1674, %v1624
      %v1690 = vmul.f32 %v1677, %v1625
      %v1691 = vmul.f32 %v1679, %v1626
      %v1692 = vmul.f32 %v1682, %v1627
      %v1693 = vmul.f32 %v1684, %v1628
      %1702 = vrot.lane.b32.xlu0 %v1686, 24
      %v1703 = vpop.permute.xlu0 %1702
      %1704 = vrot.lane.b32.xlu0 %v1687, 24
      %v1705 = vpop.permute.xlu0 %1704
      %1706 = vrot.lane.b32.xlu0 %v1688, 24
      %v1707 = vpop.permute.xlu0 %1706
      %1708 = vrot.lane.b32.xlu0 %v1689, 24
      %v1709 = vpop.permute.xlu0 %1708
      %1710 = vrot.lane.b32.xlu0 %v1690, 24
      %v1711 = vpop.permute.xlu0 %1710
      %1712 = vrot.lane.b32.xlu0 %v1691, 24
      %v1713 = vpop.permute.xlu0 %1712
      %1714 = vrot.lane.b32.xlu0 %v1692, 24
      %v1715 = vpop.permute.xlu0 %1714
      %1716 = vrot.lane.b32.xlu0 %v1693, 24
      %v1717 = vpop.permute.xlu0 %1716
      %vm1726 = vcmask 261312
      %1727 = vst.msk [vmem:[#allocation2] sm:$0xff] %vm1726, %v1703
      %1728 = vst.msk [vmem:[#allocation2 + $0x8] sm:$0xff] %vm1726, %v1705
      %1729 = vst.msk [vmem:[#allocation2 + $0x10] sm:$0xff] %vm1726, %v1707
      %1730 = vst.msk [vmem:[#allocation2 + $0x18] sm:$0xff] %vm1726, %v1709
      %1731 = vst.msk [vmem:[#allocation2 + $0x20] sm:$0xff] %vm1726, %v1711
      %1732 = vst.msk [vmem:[#allocation2 + $0x28] sm:$0xff] %vm1726, %v1713
      %1733 = vst.msk [vmem:[#allocation2 + $0x30] sm:$0xff] %vm1726, %v1715
      %1734 = vst.msk [vmem:[#allocation2 + $0x38] sm:$0xff] %vm1726, %v1717
      %v1735 = vld [vmem:[#allocation2] sm:$0xff]
      %v1736 = vld [vmem:[#allocation2 + $0x8] sm:$0xff]
      %v1737 = vld [vmem:[#allocation2 + $0x10] sm:$0xff]
      %v1738 = vld [vmem:[#allocation2 + $0x18] sm:$0xff]
      %v1739 = vld [vmem:[#allocation2 + $0x20] sm:$0xff]
      %v1740 = vld [vmem:[#allocation2 + $0x28] sm:$0xff]
      %v1741 = vld [vmem:[#allocation2 + $0x30] sm:$0xff]
      %v1742 = vld [vmem:[#allocation2 + $0x38] sm:$0xff]
      %v1743 = vpack.c.bf16 %v1736, %v1735
      %v1744 = vpack.c.bf16 %v1738, %v1737
      %v1745 = vpack.c.bf16 %v1740, %v1739
      %v1746 = vpack.c.bf16 %v1742, %v1741
      %v1747 = vld [vmem:[%s5] sm:$0xf]
      %v1748 = vld [vmem:[%s5 + $0x4] sm:$0xf]
      %v1749 = vld [vmem:[%s5 + $0x8] sm:$0xf]
      %v1750 = vld [vmem:[%s5 + $0xc] sm:$0xf]
      %v1751 = vld [vmem:[%s6] sm:$0x1]
      %v1753 = vperm.slane %v1751, 0
      %v1759 = vunpack.c.l.b16 %v1747
      %v1760 = vunpack.c.l.b16 %v1748
      %v1761 = vunpack.c.l.b16 %v1749
      %v1762 = vunpack.c.l.b16 %v1750
      %v1763 = vpack.c.b16 %v1760, %v1759
      %v1764 = vpack.c.b16 %v1762, %v1761
      %v1768 = vsel %vm455, %v1743, 0
      %v1771 = vsel %vm455, %v1744, 0
      %v1774 = vsel %vm455, %v1745, 0
      %v1777 = vsel %vm455, %v1746, 0
      %1779 = vmatpush.bf16.msra.mxu0 0
      %1780 = vmatpush.bf16.msra.mxu0 0
      %1781 = vmatpush.bf16.msra.mxu0 0
      %1782 = vmatpush.bf16.msra.mxu0 0
      %1783 = vmatpush.bf16.msra.mxu0 0
      %1784 = vmatpush.bf16.msra.mxu0 0
      %1785 = vmatpush.bf16.msra.mxu0 %v1764
      %1786 = vmatpush.bf16.msra.mxu0 %v1763
      %1787 = vmatmul.bf16.gmra.mxu0 %v1768
      %v1788 = vpop.f32.mrf.mxu0
      %v1789 = vadd.f32 %v1753, %v1788
      %v1790 = vpop.f32.mrf.mxu0
      %v1791 = vadd.f32 %v1753, %v1790
      %1792 = vmatmul.bf16.gmra.mxu0 %v1771
      %v1793 = vpop.f32.mrf.mxu0
      %v1794 = vadd.f32 %v1753, %v1793
      %v1795 = vpop.f32.mrf.mxu0
      %v1796 = vadd.f32 %v1753, %v1795
      %1797 = vmatmul.bf16.gmra.mxu0 %v1774
      %v1798 = vpop.f32.mrf.mxu0
      %v1799 = vadd.f32 %v1753, %v1798
      %v1800 = vpop.f32.mrf.mxu0
      %v1801 = vadd.f32 %v1753, %v1800
      %1802 = vmatmul.bf16.gmra.mxu0 %v1777
      %v1803 = vpop.f32.mrf.mxu0
      %v1804 = vadd.f32 %v1753, %v1803
      %v1805 = vpop.f32.mrf.mxu0
      %v1806 = vadd.f32 %v1753, %v1805
      %1807 = vdwg.mxu0
      %v1808 = vadd.f32 %v1789, %v445
      %v1809 = vadd.f32 %v1791, %v446
      %v1810 = vadd.f32 %v1794, %v447
      %v1811 = vadd.f32 %v1796, %v448
      %v1812 = vadd.f32 %v1799, %v449
      %v1813 = vadd.f32 %v1801, %v450
      %v1814 = vadd.f32 %v1804, %v451
      %v1815 = vadd.f32 %v1806, %v452
      %v1816 = vld [vmem:[%s7] sm:$0x1]
      %v1817 = vld [vmem:[%s8] sm:$0x1]
      %v1818 = vsel %vm455, %v1808, 0.0
      %1819 = vadd.xlane.f32.xlu0 %v1818
      %v1820 = vpop.xlane.xlu0 %1819
      %v1821 = vsel %vm455, %v1809, 0.0
      %1822 = vadd.xlane.f32.xlu0 %v1821
      %v1823 = vpop.xlane.xlu0 %1822
      %v1824 = vsel %vm455, %v1810, 0.0
      %1825 = vadd.xlane.f32.xlu0 %v1824
      %v1826 = vpop.xlane.xlu0 %1825
      %v1827 = vsel %vm455, %v1811, 0.0
      %1828 = vadd.xlane.f32.xlu0 %v1827
      %v1829 = vpop.xlane.xlu0 %1828
      %v1830 = vsel %vm455, %v1812, 0.0
      %1831 = vadd.xlane.f32.xlu0 %v1830
      %v1832 = vpop.xlane.xlu0 %1831
      %v1833 = vsel %vm455, %v1813, 0.0
      %1834 = vadd.xlane.f32.xlu0 %v1833
      %v1835 = vpop.xlane.xlu0 %1834
      %v1836 = vsel %vm455, %v1814, 0.0
      %1837 = vadd.xlane.f32.xlu0 %v1836
      %v1838 = vpop.xlane.xlu0 %1837
      %v1839 = vsel %vm455, %v1815, 0.0
      %1840 = vadd.xlane.f32.xlu0 %v1839
      %v1841 = vpop.xlane.xlu0 %1840
      %v1842 = vmul.f32 %v1820, %v486
      %v1843 = vmul.f32 %v1823, %v486
      %v1844 = vmul.f32 %v1826, %v486
      %v1845 = vmul.f32 %v1829, %v486
      %v1846 = vmul.f32 %v1832, %v486
      %v1847 = vmul.f32 %v1835, %v486
      %v1848 = vmul.f32 %v1838, %v486
      %v1849 = vmul.f32 %v1841, %v486
      %v1850 = vsub.f32 %v1808, %v1842
      %v1851 = vsub.f32 %v1809, %v1843
      %v1852 = vsub.f32 %v1810, %v1844
      %v1853 = vsub.f32 %v1811, %v1845
      %v1854 = vsub.f32 %v1812, %v1846
      %v1855 = vsub.f32 %v1813, %v1847
      %v1856 = vsub.f32 %v1814, %v1848
      %v1857 = vsub.f32 %v1815, %v1849
      %v1858 = vmul.f32 %v1850, %v1850
      %v1859 = vmul.f32 %v1851, %v1851
      %v1860 = vmul.f32 %v1852, %v1852
      %v1861 = vmul.f32 %v1853, %v1853
      %v1862 = vmul.f32 %v1854, %v1854
      %v1863 = vmul.f32 %v1855, %v1855
      %v1864 = vmul.f32 %v1856, %v1856
      %v1865 = vmul.f32 %v1857, %v1857
      %v1866 = vsel %vm455, %v1858, 0.0
      %1867 = vadd.xlane.f32.xlu0 %v1866
      %v1868 = vpop.xlane.xlu0 %1867
      %v1869 = vsel %vm455, %v1859, 0.0
      %1870 = vadd.xlane.f32.xlu0 %v1869
      %v1871 = vpop.xlane.xlu0 %1870
      %v1872 = vsel %vm455, %v1860, 0.0
      %1873 = vadd.xlane.f32.xlu0 %v1872
      %v1874 = vpop.xlane.xlu0 %1873
      %v1875 = vsel %vm455, %v1861, 0.0
      %1876 = vadd.xlane.f32.xlu0 %v1875
      %v1877 = vpop.xlane.xlu0 %1876
      %v1878 = vsel %vm455, %v1862, 0.0
      %1879 = vadd.xlane.f32.xlu0 %v1878
      %v1880 = vpop.xlane.xlu0 %1879
      %v1881 = vsel %vm455, %v1863, 0.0
      %1882 = vadd.xlane.f32.xlu0 %v1881
      %v1883 = vpop.xlane.xlu0 %1882
      %v1884 = vsel %vm455, %v1864, 0.0
      %1885 = vadd.xlane.f32.xlu0 %v1884
      %v1886 = vpop.xlane.xlu0 %1885
      %v1887 = vsel %vm455, %v1865, 0.0
      %1888 = vadd.xlane.f32.xlu0 %v1887
      %v1889 = vpop.xlane.xlu0 %1888
      %v1890 = vmul.f32 %v1868, %v486
      %v1891 = vmul.f32 %v1871, %v486
      %v1892 = vmul.f32 %v1874, %v486
      %v1893 = vmul.f32 %v1877, %v486
      %v1894 = vmul.f32 %v1880, %v486
      %v1895 = vmul.f32 %v1883, %v486
      %v1896 = vmul.f32 %v1886, %v486
      %v1897 = vmul.f32 %v1889, %v486
      %v1898 = vadd.f32 %v1890, 1e-05
      %v1899 = vadd.f32 %v1891, 1e-05
      %v1900 = vadd.f32 %v1892, 1e-05
      %v1901 = vadd.f32 %v1893, 1e-05
      %v1902 = vadd.f32 %v1894, 1e-05
      %v1903 = vadd.f32 %v1895, 1e-05
      %v1904 = vadd.f32 %v1896, 1e-05
      %v1905 = vadd.f32 %v1897, 1e-05
      %v1906 = vrsqrt.pop %v1898
      %v1907 = vmul.f32 %v1906, %v1898
      %v1908 = vmul.f32 %v1907, %v1906
      %v1909 = vmul.f32 0.5, %v1908
      %v1910 = vsub.f32 1.5, %v1909
      %v1911 = vmul.f32 %v1906, %v1910
      %vm1912 = vweird.f32 %v1898
      %vm1913 = vweird.f32 %v1906
      %vm1914 = vmor %vm1912, %vm1913
      %v1915 = vsel %vm1914, %v1906, %v1911
      %v1916 = vrsqrt.pop %v1899
      %v1917 = vmul.f32 %v1916, %v1899
      %v1918 = vmul.f32 %v1917, %v1916
      %v1919 = vmul.f32 0.5, %v1918
      %v1920 = vsub.f32 1.5, %v1919
      %v1921 = vmul.f32 %v1916, %v1920
      %vm1922 = vweird.f32 %v1899
      %vm1923 = vweird.f32 %v1916
      %vm1924 = vmor %vm1922, %vm1923
      %v1925 = vsel %vm1924, %v1916, %v1921
      %v1926 = vrsqrt.pop %v1900
      %v1927 = vmul.f32 %v1926, %v1900
      %v1928 = vmul.f32 %v1927, %v1926
      %v1929 = vmul.f32 0.5, %v1928
      %v1930 = vsub.f32 1.5, %v1929
      %v1931 = vmul.f32 %v1926, %v1930
      %vm1932 = vweird.f32 %v1900
      %vm1933 = vweird.f32 %v1926
      %vm1934 = vmor %vm1932, %vm1933
      %v1935 = vsel %vm1934, %v1926, %v1931
      %v1936 = vrsqrt.pop %v1901
      %v1937 = vmul.f32 %v1936, %v1901
      %v1938 = vmul.f32 %v1937, %v1936
      %v1939 = vmul.f32 0.5, %v1938
      %v1940 = vsub.f32 1.5, %v1939
      %v1941 = vmul.f32 %v1936, %v1940
      %vm1942 = vweird.f32 %v1901
      %vm1943 = vweird.f32 %v1936
      %vm1944 = vmor %vm1942, %vm1943
      %v1945 = vsel %vm1944, %v1936, %v1941
      %v1946 = vrsqrt.pop %v1902
      %v1947 = vmul.f32 %v1946, %v1902
      %v1948 = vmul.f32 %v1947, %v1946
      %v1949 = vmul.f32 0.5, %v1948
      %v1950 = vsub.f32 1.5, %v1949
      %v1951 = vmul.f32 %v1946, %v1950
      %vm1952 = vweird.f32 %v1902
      %vm1953 = vweird.f32 %v1946
      %vm1954 = vmor %vm1952, %vm1953
      %v1955 = vsel %vm1954, %v1946, %v1951
      %v1956 = vrsqrt.pop %v1903
      %v1957 = vmul.f32 %v1956, %v1903
      %v1958 = vmul.f32 %v1957, %v1956
      %v1959 = vmul.f32 0.5, %v1958
      %v1960 = vsub.f32 1.5, %v1959
      %v1961 = vmul.f32 %v1956, %v1960
      %vm1962 = vweird.f32 %v1903
      %vm1963 = vweird.f32 %v1956
      %vm1964 = vmor %vm1962, %vm1963
      %v1965 = vsel %vm1964, %v1956, %v1961
      %v1966 = vrsqrt.pop %v1904
      %v1967 = vmul.f32 %v1966, %v1904
      %v1968 = vmul.f32 %v1967, %v1966
      %v1969 = vmul.f32 0.5, %v1968
      %v1970 = vsub.f32 1.5, %v1969
      %v1971 = vmul.f32 %v1966, %v1970
      %vm1972 = vweird.f32 %v1904
      %vm1973 = vweird.f32 %v1966
      %vm1974 = vmor %vm1972, %vm1973
      %v1975 = vsel %vm1974, %v1966, %v1971
      %v1976 = vrsqrt.pop %v1905
      %v1977 = vmul.f32 %v1976, %v1905
      %v1978 = vmul.f32 %v1977, %v1976
      %v1979 = vmul.f32 0.5, %v1978
      %v1980 = vsub.f32 1.5, %v1979
      %v1981 = vmul.f32 %v1976, %v1980
      %vm1982 = vweird.f32 %v1905
      %vm1983 = vweird.f32 %v1976
      %vm1984 = vmor %vm1982, %vm1983
      %v1985 = vsel %vm1984, %v1976, %v1981
      %v1986 = vmul.f32 %v1850, %v1915
      %v1987 = vmul.f32 %v1851, %v1925
      %v1988 = vmul.f32 %v1852, %v1935
      %v1989 = vmul.f32 %v1853, %v1945
      %v1990 = vmul.f32 %v1854, %v1955
      %v1991 = vmul.f32 %v1855, %v1965
      %v1992 = vmul.f32 %v1856, %v1975
      %v1993 = vmul.f32 %v1857, %v1985
      %v1995 = vperm.slane %v1816, 0
      %v1997 = vmul.f32 %v1986, %v1995
      %v1998 = vmul.f32 %v1987, %v1995
      %v1999 = vmul.f32 %v1988, %v1995
      %v2000 = vmul.f32 %v1989, %v1995
      %v2001 = vmul.f32 %v1990, %v1995
      %v2002 = vmul.f32 %v1991, %v1995
      %v2003 = vmul.f32 %v1992, %v1995
      %v2004 = vmul.f32 %v1993, %v1995
      %v2006 = vperm.slane %v1817, 0
      %v2008 = vadd.f32 %v1997, %v2006
      %v2009 = vadd.f32 %v1998, %v2006
      %v2010 = vadd.f32 %v1999, %v2006
      %v2011 = vadd.f32 %v2000, %v2006
      %v2012 = vadd.f32 %v2001, %v2006
      %v2013 = vadd.f32 %v2002, %v2006
      %v2014 = vadd.f32 %v2003, %v2006
      %v2015 = vadd.f32 %v2004, %v2006
      %v2016 = vpack.c.bf16 %v2009, %v2008
      %v2017 = vpack.c.bf16 %v2011, %v2010
      %v2018 = vpack.c.bf16 %v2013, %v2012
      %v2019 = vpack.c.bf16 %v2015, %v2014
      %v2020 = vld [vmem:[%s9] sm:$0xf]
      %v2021 = vld [vmem:[%s9 + $0x4] sm:$0xf]
      %v2022 = vld [vmem:[%s9 + $0x8] sm:$0xf]
      %v2023 = vld [vmem:[%s9 + $0xc] sm:$0xf]
      %v2024 = vld [vmem:[%s10] sm:$0x1]
      %v2026 = vperm.slane %v2024, 0
      %v2032 = vunpack.c.l.b16 %v2020
      %v2033 = vunpack.c.l.b16 %v2021
      %v2034 = vunpack.c.l.b16 %v2022
      %v2035 = vunpack.c.l.b16 %v2023
      %v2036 = vpack.c.b16 %v2033, %v2032
      %v2037 = vpack.c.b16 %v2035, %v2034
      %v2041 = vsel %vm455, %v2016, 0
      %v2044 = vsel %vm455, %v2017, 0
      %v2047 = vsel %vm455, %v2018, 0
      %v2050 = vsel %vm455, %v2019, 0
      %2052 = vmatpush.bf16.msra.mxu0 0
      %2053 = vmatpush.bf16.msra.mxu0 0
      %2054 = vmatpush.bf16.msra.mxu0 0
      %2055 = vmatpush.bf16.msra.mxu0 0
      %2056 = vmatpush.bf16.msra.mxu0 0
      %2057 = vmatpush.bf16.msra.mxu0 0
      %2058 = vmatpush.bf16.msra.mxu0 %v2037
      %2059 = vmatpush.bf16.msra.mxu0 %v2036
      %2060 = vmatmul.bf16.gmra.mxu0 %v2041
      %v2061 = vpop.f32.mrf.mxu0
      %v2062 = vadd.f32 %v2026, %v2061
      %v2063 = vpop.f32.mrf.mxu0
      %v2064 = vadd.f32 %v2026, %v2063
      %2065 = vmatmul.bf16.gmra.mxu0 %v2044
      %v2066 = vpop.f32.mrf.mxu0
      %v2067 = vadd.f32 %v2026, %v2066
      %v2068 = vpop.f32.mrf.mxu0
      %v2069 = vadd.f32 %v2026, %v2068
      %2070 = vmatmul.bf16.gmra.mxu0 %v2047
      %v2071 = vpop.f32.mrf.mxu0
      %v2072 = vadd.f32 %v2026, %v2071
      %v2073 = vpop.f32.mrf.mxu0
      %v2074 = vadd.f32 %v2026, %v2073
      %2075 = vmatmul.bf16.gmra.mxu0 %v2050
      %v2076 = vpop.f32.mrf.mxu0
      %v2077 = vadd.f32 %v2026, %v2076
      %v2078 = vpop.f32.mrf.mxu0
      %v2079 = vadd.f32 %v2026, %v2078
      %2080 = vdwg.mxu0
      %v2081 = vmul.f32 %v2062, 0.5
      %v2082 = vmul.f32 %v2064, 0.5
      %v2083 = vmul.f32 %v2067, 0.5
      %v2084 = vmul.f32 %v2069, 0.5
      %v2085 = vmul.f32 %v2072, 0.5
      %v2086 = vmul.f32 %v2074, 0.5
      %v2087 = vmul.f32 %v2077, 0.5
      %v2088 = vmul.f32 %v2079, 0.5
      %v2089 = vmul.f32 %v2062, 0.70710677
      %v2090 = vmul.f32 %v2064, 0.70710677
      %v2091 = vmul.f32 %v2067, 0.70710677
      %v2092 = vmul.f32 %v2069, 0.70710677
      %v2093 = vmul.f32 %v2072, 0.70710677
      %v2094 = vmul.f32 %v2074, 0.70710677
      %v2095 = vmul.f32 %v2077, 0.70710677
      %v2096 = vmul.f32 %v2079, 0.70710677
      %v2097 = vmul.f32 %v2089, %v2089
      %v2098 = vmin.f32 16.0, %v2097
      %v2099 = vmul.f32 %v2098, 2.1237322e-06
      %v2100 = vadd.f32 %v2099, 0.00028619796
      %v2101 = vmul.f32 %v2098, %v2100
      %v2102 = vadd.f32 %v2101, 0.0036580483
      %v2103 = vmul.f32 %v2098, %v2102
      %v2104 = vadd.f32 %v2103, 0.05243302
      %v2105 = vmul.f32 %v2098, %v2104
      %v2106 = vadd.f32 %v2105, 0.18741608
      %v2107 = vmul.f32 %v2098, %v2106
      %v2108 = vadd.f32 %v2107, 1.1283791
      %v2109 = vmul.f32 %v2089, %v2108
      %v2110 = vmul.f32 %v2098, 3.8918573e-05
      %v2111 = vadd.f32 %v2110, 0.001143296
      %v2112 = vmul.f32 %v2098, %v2111
      %v2113 = vadd.f32 %v2112, 0.014752088
      %v2114 = vmul.f32 %v2098, %v2113
      %v2115 = vadd.f32 %v2114, 0.112945676
      %v2116 = vmul.f32 %v2098, %v2115
      %v2117 = vadd.f32 %v2116, 0.4994258
      %v2118 = vmul.f32 %v2098, %v2117
      %v2119 = vadd.f32 %v2118, 1.0
      %v2120 = vrcp.pop %v2119
      %v2121 = vmul.f32 %v2119, %v2120
      %v2122 = vsub.f32 1.0, %v2121
      %v2123 = vmul.f32 %v2120, %v2122
      %v2124 = vadd.f32 %v2120, %v2123
      %vm2125 = vweird.f32 %v2119
      %vm2126 = vweird.f32 %v2120
      %vm2127 = vmor %vm2125, %vm2126
      %v2128 = vsel %vm2127, %v2120, %v2124
      %v2129 = vand.u32 2147483647, %v2119
      %vm2130 = vcmp.eq.f32.partialorder %v2129, 8.507059e+37
      %v2131 = vand.u32 %v2119, 2147483648
      %v2132 = vor.u32 1.1754944e-38, %v2131
      %v2133 = vsel %vm2130, %v2132, %v2128
      %v2134 = vmul.f32 %v2109, %v2133
      %v2135 = vmin.f32 %v2134, 1.0
      %v2136 = vmax.f32 %v2135, -1.0
      %v2137 = vmul.f32 %v2090, %v2090
      %v2138 = vmin.f32 16.0, %v2137
      %v2139 = vmul.f32 %v2138, 2.1237322e-06
      %v2140 = vadd.f32 %v2139, 0.00028619796
      %v2141 = vmul.f32 %v2138, %v2140
      %v2142 = vadd.f32 %v2141, 0.0036580483
      %v2143 = vmul.f32 %v2138, %v2142
      %v2144 = vadd.f32 %v2143, 0.05243302
      %v2145 = vmul.f32 %v2138, %v2144
      %v2146 = vadd.f32 %v2145, 0.18741608
      %v2147 = vmul.f32 %v2138, %v2146
      %v2148 = vadd.f32 %v2147, 1.1283791
      %v2149 = vmul.f32 %v2090, %v2148
      %v2150 = vmul.f32 %v2138, 3.8918573e-05
      %v2151 = vadd.f32 %v2150, 0.001143296
      %v2152 = vmul.f32 %v2138, %v2151
      %v2153 = vadd.f32 %v2152, 0.014752088
      %v2154 = vmul.f32 %v2138, %v2153
      %v2155 = vadd.f32 %v2154, 0.112945676
      %v2156 = vmul.f32 %v2138, %v2155
      %v2157 = vadd.f32 %v2156, 0.4994258
      %v2158 = vmul.f32 %v2138, %v2157
      %v2159 = vadd.f32 %v2158, 1.0
      %v2160 = vrcp.pop %v2159
      %v2161 = vmul.f32 %v2159, %v2160
      %v2162 = vsub.f32 1.0, %v2161
      %v2163 = vmul.f32 %v2160, %v2162
      %v2164 = vadd.f32 %v2160, %v2163
      %vm2165 = vweird.f32 %v2159
      %vm2166 = vweird.f32 %v2160
      %vm2167 = vmor %vm2165, %vm2166
      %v2168 = vsel %vm2167, %v2160, %v2164
      %v2169 = vand.u32 2147483647, %v2159
      %vm2170 = vcmp.eq.f32.partialorder %v2169, 8.507059e+37
      %v2171 = vand.u32 %v2159, 2147483648
      %v2172 = vor.u32 1.1754944e-38, %v2171
      %v2173 = vsel %vm2170, %v2172, %v2168
      %v2174 = vmul.f32 %v2149, %v2173
      %v2175 = vmin.f32 %v2174, 1.0
      %v2176 = vmax.f32 %v2175, -1.0
      %v2177 = vmul.f32 %v2091, %v2091
      %v2178 = vmin.f32 16.0, %v2177
      %v2179 = vmul.f32 %v2178, 2.1237322e-06
      %v2180 = vadd.f32 %v2179, 0.00028619796
      %v2181 = vmul.f32 %v2178, %v2180
      %v2182 = vadd.f32 %v2181, 0.0036580483
      %v2183 = vmul.f32 %v2178, %v2182
      %v2184 = vadd.f32 %v2183, 0.05243302
      %v2185 = vmul.f32 %v2178, %v2184
      %v2186 = vadd.f32 %v2185, 0.18741608
      %v2187 = vmul.f32 %v2178, %v2186
      %v2188 = vadd.f32 %v2187, 1.1283791
      %v2189 = vmul.f32 %v2091, %v2188
      %v2190 = vmul.f32 %v2178, 3.8918573e-05
      %v2191 = vadd.f32 %v2190, 0.001143296
      %v2192 = vmul.f32 %v2178, %v2191
      %v2193 = vadd.f32 %v2192, 0.014752088
      %v2194 = vmul.f32 %v2178, %v2193
      %v2195 = vadd.f32 %v2194, 0.112945676
      %v2196 = vmul.f32 %v2178, %v2195
      %v2197 = vadd.f32 %v2196, 0.4994258
      %v2198 = vmul.f32 %v2178, %v2197
      %v2199 = vadd.f32 %v2198, 1.0
      %v2200 = vrcp.pop %v2199
      %v2201 = vmul.f32 %v2199, %v2200
      %v2202 = vsub.f32 1.0, %v2201
      %v2203 = vmul.f32 %v2200, %v2202
      %v2204 = vadd.f32 %v2200, %v2203
      %vm2205 = vweird.f32 %v2199
      %vm2206 = vweird.f32 %v2200
      %vm2207 = vmor %vm2205, %vm2206
      %v2208 = vsel %vm2207, %v2200, %v2204
      %v2209 = vand.u32 2147483647, %v2199
      %vm2210 = vcmp.eq.f32.partialorder %v2209, 8.507059e+37
      %v2211 = vand.u32 %v2199, 2147483648
      %v2212 = vor.u32 1.1754944e-38, %v2211
      %v2213 = vsel %vm2210, %v2212, %v2208
      %v2214 = vmul.f32 %v2189, %v2213
      %v2215 = vmin.f32 %v2214, 1.0
      %v2216 = vmax.f32 %v2215, -1.0
      %v2217 = vmul.f32 %v2092, %v2092
      %v2218 = vmin.f32 16.0, %v2217
      %v2219 = vmul.f32 %v2218, 2.1237322e-06
      %v2220 = vadd.f32 %v2219, 0.00028619796
      %v2221 = vmul.f32 %v2218, %v2220
      %v2222 = vadd.f32 %v2221, 0.0036580483
      %v2223 = vmul.f32 %v2218, %v2222
      %v2224 = vadd.f32 %v2223, 0.05243302
      %v2225 = vmul.f32 %v2218, %v2224
      %v2226 = vadd.f32 %v2225, 0.18741608
      %v2227 = vmul.f32 %v2218, %v2226
      %v2228 = vadd.f32 %v2227, 1.1283791
      %v2229 = vmul.f32 %v2092, %v2228
      %v2230 = vmul.f32 %v2218, 3.8918573e-05
      %v2231 = vadd.f32 %v2230, 0.001143296
      %v2232 = vmul.f32 %v2218, %v2231
      %v2233 = vadd.f32 %v2232, 0.014752088
      %v2234 = vmul.f32 %v2218, %v2233
      %v2235 = vadd.f32 %v2234, 0.112945676
      %v2236 = vmul.f32 %v2218, %v2235
      %v2237 = vadd.f32 %v2236, 0.4994258
      %v2238 = vmul.f32 %v2218, %v2237
      %v2239 = vadd.f32 %v2238, 1.0
      %v2240 = vrcp.pop %v2239
      %v2241 = vmul.f32 %v2239, %v2240
      %v2242 = vsub.f32 1.0, %v2241
      %v2243 = vmul.f32 %v2240, %v2242
      %v2244 = vadd.f32 %v2240, %v2243
      %vm2245 = vweird.f32 %v2239
      %vm2246 = vweird.f32 %v2240
      %vm2247 = vmor %vm2245, %vm2246
      %v2248 = vsel %vm2247, %v2240, %v2244
      %v2249 = vand.u32 2147483647, %v2239
      %vm2250 = vcmp.eq.f32.partialorder %v2249, 8.507059e+37
      %v2251 = vand.u32 %v2239, 2147483648
      %v2252 = vor.u32 1.1754944e-38, %v2251
      %v2253 = vsel %vm2250, %v2252, %v2248
      %v2254 = vmul.f32 %v2229, %v2253
      %v2255 = vmin.f32 %v2254, 1.0
      %v2256 = vmax.f32 %v2255, -1.0
      %v2257 = vmul.f32 %v2093, %v2093
      %v2258 = vmin.f32 16.0, %v2257
      %v2259 = vmul.f32 %v2258, 2.1237322e-06
      %v2260 = vadd.f32 %v2259, 0.00028619796
      %v2261 = vmul.f32 %v2258, %v2260
      %v2262 = vadd.f32 %v2261, 0.0036580483
      %v2263 = vmul.f32 %v2258, %v2262
      %v2264 = vadd.f32 %v2263, 0.05243302
      %v2265 = vmul.f32 %v2258, %v2264
      %v2266 = vadd.f32 %v2265, 0.18741608
      %v2267 = vmul.f32 %v2258, %v2266
      %v2268 = vadd.f32 %v2267, 1.1283791
      %v2269 = vmul.f32 %v2093, %v2268
      %v2270 = vmul.f32 %v2258, 3.8918573e-05
      %v2271 = vadd.f32 %v2270, 0.001143296
      %v2272 = vmul.f32 %v2258, %v2271
      %v2273 = vadd.f32 %v2272, 0.014752088
      %v2274 = vmul.f32 %v2258, %v2273
      %v2275 = vadd.f32 %v2274, 0.112945676
      %v2276 = vmul.f32 %v2258, %v2275
      %v2277 = vadd.f32 %v2276, 0.4994258
      %v2278 = vmul.f32 %v2258, %v2277
      %v2279 = vadd.f32 %v2278, 1.0
      %v2280 = vrcp.pop %v2279
      %v2281 = vmul.f32 %v2279, %v2280
      %v2282 = vsub.f32 1.0, %v2281
      %v2283 = vmul.f32 %v2280, %v2282
      %v2284 = vadd.f32 %v2280, %v2283
      %vm2285 = vweird.f32 %v2279
      %vm2286 = vweird.f32 %v2280
      %vm2287 = vmor %vm2285, %vm2286
      %v2288 = vsel %vm2287, %v2280, %v2284
      %v2289 = vand.u32 2147483647, %v2279
      %vm2290 = vcmp.eq.f32.partialorder %v2289, 8.507059e+37
      %v2291 = vand.u32 %v2279, 2147483648
      %v2292 = vor.u32 1.1754944e-38, %v2291
      %v2293 = vsel %vm2290, %v2292, %v2288
      %v2294 = vmul.f32 %v2269, %v2293
      %v2295 = vmin.f32 %v2294, 1.0
      %v2296 = vmax.f32 %v2295, -1.0
      %v2297 = vmul.f32 %v2094, %v2094
      %v2298 = vmin.f32 16.0, %v2297
      %v2299 = vmul.f32 %v2298, 2.1237322e-06
      %v2300 = vadd.f32 %v2299, 0.00028619796
      %v2301 = vmul.f32 %v2298, %v2300
      %v2302 = vadd.f32 %v2301, 0.0036580483
      %v2303 = vmul.f32 %v2298, %v2302
      %v2304 = vadd.f32 %v2303, 0.05243302
      %v2305 = vmul.f32 %v2298, %v2304
      %v2306 = vadd.f32 %v2305, 0.18741608
      %v2307 = vmul.f32 %v2298, %v2306
      %v2308 = vadd.f32 %v2307, 1.1283791
      %v2309 = vmul.f32 %v2094, %v2308
      %v2310 = vmul.f32 %v2298, 3.8918573e-05
      %v2311 = vadd.f32 %v2310, 0.001143296
      %v2312 = vmul.f32 %v2298, %v2311
      %v2313 = vadd.f32 %v2312, 0.014752088
      %v2314 = vmul.f32 %v2298, %v2313
      %v2315 = vadd.f32 %v2314, 0.112945676
      %v2316 = vmul.f32 %v2298, %v2315
      %v2317 = vadd.f32 %v2316, 0.4994258
      %v2318 = vmul.f32 %v2298, %v2317
      %v2319 = vadd.f32 %v2318, 1.0
      %v2320 = vrcp.pop %v2319
      %v2321 = vmul.f32 %v2319, %v2320
      %v2322 = vsub.f32 1.0, %v2321
      %v2323 = vmul.f32 %v2320, %v2322
      %v2324 = vadd.f32 %v2320, %v2323
      %vm2325 = vweird.f32 %v2319
      %vm2326 = vweird.f32 %v2320
      %vm2327 = vmor %vm2325, %vm2326
      %v2328 = vsel %vm2327, %v2320, %v2324
      %v2329 = vand.u32 2147483647, %v2319
      %vm2330 = vcmp.eq.f32.partialorder %v2329, 8.507059e+37
      %v2331 = vand.u32 %v2319, 2147483648
      %v2332 = vor.u32 1.1754944e-38, %v2331
      %v2333 = vsel %vm2330, %v2332, %v2328
      %v2334 = vmul.f32 %v2309, %v2333
      %v2335 = vmin.f32 %v2334, 1.0
      %v2336 = vmax.f32 %v2335, -1.0
      %v2337 = vmul.f32 %v2095, %v2095
      %v2338 = vmin.f32 16.0, %v2337
      %v2339 = vmul.f32 %v2338, 2.1237322e-06
      %v2340 = vadd.f32 %v2339, 0.00028619796
      %v2341 = vmul.f32 %v2338, %v2340
      %v2342 = vadd.f32 %v2341, 0.0036580483
      %v2343 = vmul.f32 %v2338, %v2342
      %v2344 = vadd.f32 %v2343, 0.05243302
      %v2345 = vmul.f32 %v2338, %v2344
      %v2346 = vadd.f32 %v2345, 0.18741608
      %v2347 = vmul.f32 %v2338, %v2346
      %v2348 = vadd.f32 %v2347, 1.1283791
      %v2349 = vmul.f32 %v2095, %v2348
      %v2350 = vmul.f32 %v2338, 3.8918573e-05
      %v2351 = vadd.f32 %v2350, 0.001143296
      %v2352 = vmul.f32 %v2338, %v2351
      %v2353 = vadd.f32 %v2352, 0.014752088
      %v2354 = vmul.f32 %v2338, %v2353
      %v2355 = vadd.f32 %v2354, 0.112945676
      %v2356 = vmul.f32 %v2338, %v2355
      %v2357 = vadd.f32 %v2356, 0.4994258
      %v2358 = vmul.f32 %v2338, %v2357
      %v2359 = vadd.f32 %v2358, 1.0
      %v2360 = vrcp.pop %v2359
      %v2361 = vmul.f32 %v2359, %v2360
      %v2362 = vsub.f32 1.0, %v2361
      %v2363 = vmul.f32 %v2360, %v2362
      %v2364 = vadd.f32 %v2360, %v2363
      %vm2365 = vweird.f32 %v2359
      %vm2366 = vweird.f32 %v2360
      %vm2367 = vmor %vm2365, %vm2366
      %v2368 = vsel %vm2367, %v2360, %v2364
      %v2369 = vand.u32 2147483647, %v2359
      %vm2370 = vcmp.eq.f32.partialorder %v2369, 8.507059e+37
      %v2371 = vand.u32 %v2359, 2147483648
      %v2372 = vor.u32 1.1754944e-38, %v2371
      %v2373 = vsel %vm2370, %v2372, %v2368
      %v2374 = vmul.f32 %v2349, %v2373
      %v2375 = vmin.f32 %v2374, 1.0
      %v2376 = vmax.f32 %v2375, -1.0
      %v2377 = vmul.f32 %v2096, %v2096
      %v2378 = vmin.f32 16.0, %v2377
      %v2379 = vmul.f32 %v2378, 2.1237322e-06
      %v2380 = vadd.f32 %v2379, 0.00028619796
      %v2381 = vmul.f32 %v2378, %v2380
      %v2382 = vadd.f32 %v2381, 0.0036580483
      %v2383 = vmul.f32 %v2378, %v2382
      %v2384 = vadd.f32 %v2383, 0.05243302
      %v2385 = vmul.f32 %v2378, %v2384
      %v2386 = vadd.f32 %v2385, 0.18741608
      %v2387 = vmul.f32 %v2378, %v2386
      %v2388 = vadd.f32 %v2387, 1.1283791
      %v2389 = vmul.f32 %v2096, %v2388
      %v2390 = vmul.f32 %v2378, 3.8918573e-05
      %v2391 = vadd.f32 %v2390, 0.001143296
      %v2392 = vmul.f32 %v2378, %v2391
      %v2393 = vadd.f32 %v2392, 0.014752088
      %v2394 = vmul.f32 %v2378, %v2393
      %v2395 = vadd.f32 %v2394, 0.112945676
      %v2396 = vmul.f32 %v2378, %v2395
      %v2397 = vadd.f32 %v2396, 0.4994258
      %v2398 = vmul.f32 %v2378, %v2397
      %v2399 = vadd.f32 %v2398, 1.0
      %v2400 = vrcp.pop %v2399
      %v2401 = vmul.f32 %v2399, %v2400
      %v2402 = vsub.f32 1.0, %v2401
      %v2403 = vmul.f32 %v2400, %v2402
      %v2404 = vadd.f32 %v2400, %v2403
      %vm2405 = vweird.f32 %v2399
      %vm2406 = vweird.f32 %v2400
      %vm2407 = vmor %vm2405, %vm2406
      %v2408 = vsel %vm2407, %v2400, %v2404
      %v2409 = vand.u32 2147483647, %v2399
      %vm2410 = vcmp.eq.f32.partialorder %v2409, 8.507059e+37
      %v2411 = vand.u32 %v2399, 2147483648
      %v2412 = vor.u32 1.1754944e-38, %v2411
      %v2413 = vsel %vm2410, %v2412, %v2408
      %v2414 = vmul.f32 %v2389, %v2413
      %v2415 = vmin.f32 %v2414, 1.0
      %v2416 = vmax.f32 %v2415, -1.0
      %v2417 = vadd.f32 %v2136, 1.0
      %v2418 = vadd.f32 %v2176, 1.0
      %v2419 = vadd.f32 %v2216, 1.0
      %v2420 = vadd.f32 %v2256, 1.0
      %v2421 = vadd.f32 %v2296, 1.0
      %v2422 = vadd.f32 %v2336, 1.0
      %v2423 = vadd.f32 %v2376, 1.0
      %v2424 = vadd.f32 %v2416, 1.0
      %v2425 = vmul.f32 %v2081, %v2417
      %v2426 = vmul.f32 %v2082, %v2418
      %v2427 = vmul.f32 %v2083, %v2419
      %v2428 = vmul.f32 %v2084, %v2420
      %v2429 = vmul.f32 %v2085, %v2421
      %v2430 = vmul.f32 %v2086, %v2422
      %v2431 = vmul.f32 %v2087, %v2423
      %v2432 = vmul.f32 %v2088, %v2424
      %v2433 = vpack.c.bf16 %v2426, %v2425
      %v2434 = vpack.c.bf16 %v2428, %v2427
      %v2435 = vpack.c.bf16 %v2430, %v2429
      %v2436 = vpack.c.bf16 %v2432, %v2431
      %v2437 = vld [vmem:[%s11] sm:$0xf]
      %v2438 = vld [vmem:[%s11 + $0x4] sm:$0xf]
      %v2439 = vld [vmem:[%s11 + $0x8] sm:$0xf]
      %v2440 = vld [vmem:[%s11 + $0xc] sm:$0xf]
      %v2441 = vld [vmem:[%s12] sm:$0x1]
      %v2443 = vperm.slane %v2441, 0
      %v2449 = vunpack.c.l.b16 %v2437
      %v2450 = vunpack.c.l.b16 %v2438
      %v2451 = vunpack.c.l.b16 %v2439
      %v2452 = vunpack.c.l.b16 %v2440
      %v2453 = vpack.c.b16 %v2450, %v2449
      %v2454 = vpack.c.b16 %v2452, %v2451
      %v2458 = vsel %vm455, %v2433, 0
      %v2461 = vsel %vm455, %v2434, 0
      %v2464 = vsel %vm455, %v2435, 0
      %v2467 = vsel %vm455, %v2436, 0
      %2469 = vmatpush.bf16.msra.mxu0 0
      %2470 = vmatpush.bf16.msra.mxu0 0
      %2471 = vmatpush.bf16.msra.mxu0 0
      %2472 = vmatpush.bf16.msra.mxu0 0
      %2473 = vmatpush.bf16.msra.mxu0 0
      %2474 = vmatpush.bf16.msra.mxu0 0
      %2475 = vmatpush.bf16.msra.mxu0 %v2454
      %2476 = vmatpush.bf16.msra.mxu0 %v2453
      %2477 = vmatmul.bf16.gmra.mxu0 %v2458
      %v2478 = vpop.f32.mrf.mxu0
      %v2479 = vadd.f32 %v2443, %v2478
      %v2480 = vpop.f32.mrf.mxu0
      %v2481 = vadd.f32 %v2443, %v2480
      %2482 = vmatmul.bf16.gmra.mxu0 %v2461
      %v2483 = vpop.f32.mrf.mxu0
      %v2484 = vadd.f32 %v2443, %v2483
      %v2485 = vpop.f32.mrf.mxu0
      %v2486 = vadd.f32 %v2443, %v2485
      %2487 = vmatmul.bf16.gmra.mxu0 %v2464
      %v2488 = vpop.f32.mrf.mxu0
      %v2489 = vadd.f32 %v2443, %v2488
      %v2490 = vpop.f32.mrf.mxu0
      %v2491 = vadd.f32 %v2443, %v2490
      %2492 = vmatmul.bf16.gmra.mxu0 %v2467
      %v2493 = vpop.f32.mrf.mxu0
      %v2494 = vadd.f32 %v2443, %v2493
      %v2495 = vpop.f32.mrf.mxu0
      %v2496 = vadd.f32 %v2443, %v2495
      %2497 = vdwg.mxu0
      %v2498 = vadd.f32 %v2479, %v1808
      %v2499 = vadd.f32 %v2481, %v1809
      %v2500 = vadd.f32 %v2484, %v1810
      %v2501 = vadd.f32 %v2486, %v1811
      %v2502 = vadd.f32 %v2489, %v1812
      %v2503 = vadd.f32 %v2491, %v1813
      %v2504 = vadd.f32 %v2494, %v1814
      %v2505 = vadd.f32 %v2496, %v1815
      %2506 = vst.msk [vmem:[%s442] sm:$0xff] %vm455, %v2498
      %2507 = vst.msk [vmem:[%s442 + $0x8] sm:$0xff] %vm455, %v2499
      %2508 = vst.msk [vmem:[%s442 + $0x10] sm:$0xff] %vm455, %v2500
      %2509 = vst.msk [vmem:[%s442 + $0x18] sm:$0xff] %vm455, %v2501
      %2510 = vst.msk [vmem:[%s442 + $0x20] sm:$0xff] %vm455, %v2502
      %2511 = vst.msk [vmem:[%s442 + $0x28] sm:$0xff] %vm455, %v2503
      %2512 = vst.msk [vmem:[%s442 + $0x30] sm:$0xff] %vm455, %v2504
      %2513 = vst.msk [vmem:[%s442 + $0x38] sm:$0xff] %vm455, %v2505
      %s2514 = smul.u32 8, %s24
      %p2515 = scmp.lt.s32.totalorder %s2514, 15
      %s2516 = scalar_select %p2515, %s2514, 15
      %s2517 = smul.addr %s2516, 8
      %s2518 = scalar_lea.vmem %s13, %s2517
      // Predicated region
      $region73: #{tpu_custom_call.1} parent=71 // pred_check
        %p2519 = pneg %p320
      $region74: #{tpu_custom_call.1} parent=71 // pred_check_branch
        %2521 = sbr.rel (%p2519) target = $region76
      $region75: #{tpu_custom_call.1} parent=71 // pred_region
        %s2522 = smul.u32 8, %s24
      $region76: #{tpu_custom_call.1} parent=71 // pred_fallthru
        _
    $region72: #{tpu_custom_call.1} parent=5 // pred_fallthru
      _
    %p2523 = scmp.le.s32.totalorder 2, %s19
    // Predicated region
    $region77: #{tpu_custom_call.1} parent=5 // pred_check
      %p2524 = pneg %p2523
    $region78: #{tpu_custom_call.1} parent=5 // pred_check_branch
      %2526 = sbr.rel (%p2524) target = $region80
    $region79: #{tpu_custom_call.1} parent=5 // pred_region
      %s2527 = ssub.s32 %s19, 2
      // Predicated region
      $region81: #{tpu_custom_call.1} parent=79 // pred_check
        %p2528 = pneg %p326
      $region82: #{tpu_custom_call.1} parent=79 // pred_check_branch
        %2530 = sbr.rel (%p2528) target = $region84
      $region83: #{tpu_custom_call.1} parent=79 // pred_region
        %s2531 = smul.u32 8, %s25
        %p2532 = scmp.lt.s32.totalorder %s2531, 15
        %s2533 = scalar_select %p2532, %s2531, 15
        %s2534 = smul.addr %s2533, 8
        %s2535 = scalar_lea.vmem %s13, %s2534
      $region84: #{tpu_custom_call.1} parent=79 // pred_fallthru
        _
    $region80: #{tpu_custom_call.1} parent=5 // pred_fallthru
      _
  $region6: #{tpu_custom_call.1} parent=0 // loop_footer
    %s23 = sadd.s32 1, %s19
  $region7: #{tpu_custom_call.1} parent=0 // loop_footer_branch
    %18 = sbr.rel target = $region3
  $region8: #{tpu_custom_call.1} parent=0 // loop_exit
    _

</llo_original>
